<compile_context>
chip_gen: v5e
topology: v5e:2x2
jax: 0.10.0
libtpu: 0.0.40
codegen_flags: <defaults>
</compile_context>

<pallas_src>
import functools

import jax
import jax.numpy as jnp
from jax import lax
from jax.experimental import pallas as pl
from jax.experimental.pallas import tpu as pltpu

_BN_EPS = 1e-5
_MAX_TM = 4096          # upper bound on matmul row tiles (review: 2048-4096)


def _round_up(a, b):
    return (a + b - 1) // b * b


# --------------------- generation-aware VMEM budgeting -----------------------
def _vmem_limit_bytes():
    """Scoped-VMEM limit derived from the actual chip: ~48 MiB on 64-MiB
    (v7x-class) parts, ~96 MiB on 128-MiB (v5e/v6e) parts, safe fallback."""
    cap = 64 << 20                                   # conservative default
    try:
        info = pltpu.get_tpu_info()
        for attr in ("vmem_capacity_bytes", "vmem_bytes", "vmem_size_bytes"):
            val = getattr(info, attr, None)
            if val:
                cap = int(val)
                break
    except Exception:
        pass
    return min((cap * 3) // 4, 100 << 20)


_VMEM_LIMIT = _vmem_limit_bytes()


# ---------------- single-buffered specs for grid-invariant blocks ------------
def _buffered1_supported():
    """Probe whether pipeline_mode=pl.Buffered(1) lowers on this jax/libtpu."""
    def k(x_ref, o_ref):
        o_ref[...] = x_ref[...]
    try:
        fn = pl.pallas_call(
            k,
            out_shape=jax.ShapeDtypeStruct((8, 128), jnp.float32),
            grid=(2,),
            in_specs=[pl.BlockSpec((8, 128), lambda i: (0, 0),
                                   pipeline_mode=pl.Buffered(1))],
            out_specs=pl.BlockSpec((8, 128), lambda i: (0, 0)),
        )
        jax.jit(fn).lower(jnp.zeros((8, 128), jnp.float32)).compile()
        return True
    except Exception:
        return False


_USE_BUFFERED1 = _buffered1_supported()


def _const_spec(shape, index_map):
    """BlockSpec for a grid-invariant block (weights / biases): single-buffer
    it when supported so resident weights don't pay 2x VMEM."""
    if _USE_BUFFERED1:
        return pl.BlockSpec(shape, index_map, pipeline_mode=pl.Buffered(1))
    return pl.BlockSpec(shape, index_map)


# ------------------------------ tile selection --------------------------------
def _pick_tm(m, per_row_bytes, resident_bytes, vmem_limit):
    """Largest M row-tile (multiple of 128, <= _MAX_TM) whose double-buffered
    working set fits the VMEM budget.  Narrow 1x1 layers get very tall tiles
    so per-grid-step overhead (~600 cycles) is amortized."""
    if m <= 128:
        return m                                      # full-dim block
    budget = max(vmem_limit - resident_bytes - (4 << 20), 1 << 20)
    tm = budget // max(per_row_bytes, 1)
    tm = min(tm, m, _MAX_TM)
    return max((tm // 128) * 128, 128)


def _pick_row_tile(ho, wo):
    """Output-row strip for conv2: ~512 matmul rows per grid step, divides Ho,
    keeps the sublane extent (rt*Wo) 8-aligned (or equal to the full extent)."""
    target = max(1, 512 // max(wo, 1))
    for rt in range(min(ho, target), 0, -1):
        if ho % rt == 0 and (rt == ho or (rt * wo) % 8 == 0):
            return rt
    return ho


# ----------------------------- Pallas kernels -------------------------------
def _matmul_kernel(x_ref, w_ref, b_ref, *rest, has_proj, has_res, relu):
    """acc = x@w + b [+ xs@ws + bs] [+ residual]; optional ReLU; f32 accumulate.

    NOTE: when M % tm != 0 the last grid step feeds Pallas-padded (unspecified)
    rows through the MXU.  Safe here because the epilogue is purely row-wise
    and only valid output rows are written back; do not add a cross-row
    reduction to this epilogue without masking those rows.
    """
    o_ref = rest[-1]
    acc = jnp.dot(x_ref[...], w_ref[...], preferred_element_type=jnp.float32)
    acc = acc + b_ref[...]
    idx = 0
    if has_proj:  # fused projection shortcut: second dot shares the output tile
        acc = acc + jnp.dot(rest[0][...], rest[1][...],
                            preferred_element_type=jnp.float32)
        acc = acc + rest[2][...]
        idx = 3
    if has_res:   # fused identity-shortcut residual add
        acc = acc + rest[idx][...].astype(jnp.float32)
    if relu:
        acc = jnp.maximum(acc, 0.0)
    o_ref[...] = acc.astype(o_ref.dtype)


def _conv3x3_kernel(x_ref, w_ref, b_ref, o_ref, *, stride, rt, wo, c,
                    use_im2col):
    """Direct 3x3 conv for a strip of `rt` output rows of one image.

    x_ref: (s*s, Hs, Ws, C)  phase-split padded image (resident across the
                             row-strip grid axis: index_map constant in r)
    w_ref: (9*C, Cout) if use_im2col else (9, C, Cout)  (BN scale folded in)
    b_ref: (1, Cout)
    o_ref: (1, rt*Wo, Cout)
    """
    s = stride
    r0 = pl.program_id(1) * rt
    wins = []
    for dh in range(3):
        ph, ih = dh % s, dh // s
        for dw in range(3):
            pw, iw = dw % s, dw // s
            win = x_ref[ph * s + pw, pl.ds(r0 + ih, rt), pl.ds(iw, wo), :]
            wins.append(win.reshape(rt * wo, c))
    if use_im2col:
        # In-VMEM im2col: one (rt*Wo, 9C) x (9C, Cout) matmul.  Contraction
        # depth 9C actually fills the MXU instead of 9 tiny-K matmuls with
        # 9 accumulator read-modify-write passes.
        patch = jnp.concatenate(wins, axis=-1)
        acc = jnp.dot(patch, w_ref[...], preferred_element_type=jnp.float32)
    else:
        # Narrow / non-lane-aligned channel counts: accumulate the 9 taps
        # (minor-dim concat relayout is not worth it when C << 128).
        acc = jnp.zeros((rt * wo, w_ref.shape[-1]), jnp.float32)
        for k in range(9):
            acc = acc + jnp.dot(wins[k], w_ref[k],
                                preferred_element_type=jnp.float32)
    acc = acc + b_ref[...]
    o_ref[0] = jnp.maximum(acc, 0.0).astype(o_ref.dtype)


# ----------------------------- kernel wrappers -------------------------------
def fused_matmul(x, w, bias, *, proj=None, residual=None, relu=True,
                 out_dtype=jnp.bfloat16):
    """out = act(x @ w + bias [+ xs @ ws + bs] [+ residual]).  x:(M,K) bf16."""
    M, K = x.shape
    N = w.shape[1]
    out_isz = jnp.dtype(out_dtype).itemsize
    has_proj = proj is not None
    has_res = residual is not None

    # VMEM accounting for the row-tile choice: resident (single-buffered)
    # weights/biases + double-buffered per-row tiles + f32 epilogue slack.
    resident = K * N * w.dtype.itemsize + bias.size * bias.dtype.itemsize
    per_row = 2 * K * x.dtype.itemsize + 2 * N * out_isz + 4 * N
    if has_proj:
        xs, ws, bs = proj
        Ks = xs.shape[1]
        resident += Ks * N * ws.dtype.itemsize + bs.size * bs.dtype.itemsize
        per_row += 2 * Ks * xs.dtype.itemsize
    if has_res:
        per_row += 2 * N * residual.dtype.itemsize

    tm = _pick_tm(M, per_row, resident, _VMEM_LIMIT)
    grid = (pl.cdiv(M, tm),)

    in_specs = [pl.BlockSpec((tm, K), lambda i: (i, 0)),
                _const_spec((K, N), lambda i: (0, 0)),
                _const_spec((1, N), lambda i: (0, 0))]
    args = [x, w, bias]
    flops = 2 * M * K * N
    nbytes = (x.size * x.dtype.itemsize + w.size * w.dtype.itemsize
              + bias.size * bias.dtype.itemsize)
    if has_proj:
        in_specs += [pl.BlockSpec((tm, Ks), lambda i: (i, 0)),
                     _const_spec((Ks, N), lambda i: (0, 0)),
                     _const_spec((1, N), lambda i: (0, 0))]
        args += [xs, ws, bs]
        flops += 2 * M * Ks * N
        nbytes += (xs.size * xs.dtype.itemsize + ws.size * ws.dtype.itemsize
                   + bs.size * bs.dtype.itemsize)
    if has_res:
        in_specs.append(pl.BlockSpec((tm, N), lambda i: (i, 0)))
        args.append(residual)
        nbytes += residual.size * residual.dtype.itemsize
    nbytes += M * N * out_isz

    kernel = functools.partial(_matmul_kernel, has_proj=has_proj,
                               has_res=has_res, relu=relu)
    return pl.pallas_call(
        kernel,
        out_shape=jax.ShapeDtypeStruct((M, N), out_dtype),
        grid=grid,
        in_specs=in_specs,
        out_specs=pl.BlockSpec((tm, N), lambda i: (i, 0)),
        compiler_params=pltpu.CompilerParams(
            dimension_semantics=("parallel",),
            vmem_limit_bytes=_VMEM_LIMIT),
        cost_estimate=pl.CostEstimate(flops=int(flops), transcendentals=0,
                                      bytes_accessed=int(nbytes)),
    )(*args)


def conv3x3_bn_relu(h, w9, bias, stride):
    """3x3, padding=1, stride-s conv + folded-BN bias + ReLU.
    h: (N,H,W,C) bf16, w9: (9,C,Cout) bf16, bias: (1,Cout) f32."""
    N, H, W, C = h.shape
    Cout = w9.shape[-1]
    s = stride
    Ho = (H - 1) // s + 1
    Wo = (W - 1) // s + 1
    Hpp = _round_up(H + 2, s)
    Wpp = _round_up(W + 2, s)
    Hs, Ws = Hpp // s, Wpp // s

    # Single spatial zero-pad + (for stride>1) phase split so every tap in the
    # kernel is a contiguous (unstrided) window.  For stride=1 the transpose
    # is a no-op permutation of singleton axes.
    xp = jnp.pad(h, ((0, 0), (1, Hpp - H - 1), (1, Wpp - W - 1), (0, 0)))
    xph = xp.reshape(N, Hs, s, Ws, s, C).transpose(0, 2, 4, 1, 3, 5)
    xph = xph.reshape(N * s * s, Hs, Ws, C)

    rt = _pick_row_tile(Ho, Wo)
    n_rt = Ho // rt
    # im2col (single 9C-deep matmul) only for lane-aligned channel counts;
    # narrow widths (unit-test C=4) keep the proven 9-tap accumulate path.
    use_im2col = (C % 128 == 0)
    w_arg = w9.reshape(9 * C, Cout) if use_im2col else w9
    w_spec = (_const_spec((9 * C, Cout), lambda n, r: (0, 0)) if use_im2col
              else _const_spec((9, C, Cout), lambda n, r: (0, 0, 0)))

    kernel = functools.partial(_conv3x3_kernel, stride=s, rt=rt, wo=Wo, c=C,
                               use_im2col=use_im2col)
    out = pl.pallas_call(
        kernel,
        out_shape=jax.ShapeDtypeStruct((N, Ho * Wo, Cout), jnp.bfloat16),
        # images x output-row strips: deeper pipeline, and both v7x
        # TensorCores get work even at batch 1.
        grid=(N, n_rt),
        in_specs=[
            # Padded image resident across the row-strip axis (index_map is
            # constant in r -> DMA'd once per image, reused by every strip).
            pl.BlockSpec((s * s, Hs, Ws, C), lambda n, r: (n, 0, 0, 0)),
            w_spec,
            _const_spec((1, Cout), lambda n, r: (0, 0)),
        ],
        out_specs=pl.BlockSpec((1, rt * Wo, Cout), lambda n, r: (n, r, 0)),
        compiler_params=pltpu.CompilerParams(
            dimension_semantics=("parallel", "parallel"),
            vmem_limit_bytes=_VMEM_LIMIT),
        cost_estimate=pl.CostEstimate(
            flops=int(2 * N * Ho * Wo * 9 * C * Cout), transcendentals=0,
            bytes_accessed=int(xph.size * xph.dtype.itemsize
                               + w9.size * w9.dtype.itemsize
                               + bias.size * bias.dtype.itemsize
                               + N * Ho * Wo * Cout * 2)),
    )(xph, w_arg, bias)
    return out, Ho, Wo


# ------------------------------- parameters ----------------------------------
def make_params(key, in_channels, channels, stride):
    """Raw PyTorch-like parameters: HWIO conv weights + BN (gamma,beta,mean,var)."""
    E = 4 * channels
    keys = jax.random.split(key, 8)

    def conv(k, kh, kw, cin, cout):
        fan_in = kh * kw * cin
        return jax.random.normal(k, (kh, kw, cin, cout), jnp.float32) / jnp.sqrt(fan_in)

    def bn(k, c):
        k1, k2, k3, k4 = jax.random.split(k, 4)
        gamma = 1.0 + 0.1 * jax.random.normal(k1, (c,), jnp.float32)
        beta = 0.1 * jax.random.normal(k2, (c,), jnp.float32)
        rmean = 0.05 * jax.random.normal(k3, (c,), jnp.float32)
        rvar = 1.0 + 0.1 * jax.random.uniform(k4, (c,), jnp.float32)
        return gamma, beta, rmean, rvar

    params = {"w1": conv(keys[0], 1, 1, in_channels, channels), "bn1": bn(keys[1], channels),
              "w2": conv(keys[2], 3, 3, channels, channels),    "bn2": bn(keys[3], channels),
              "w3": conv(keys[4], 1, 1, channels, E),           "bn3": bn(keys[5], E)}
    if stride != 1 or in_channels != E:
        params["ws"] = conv(keys[6], 1, 1, in_channels, E)
        params["bns"] = bn(keys[7], E)
    return params


def prepare_params(params):
    """Fold eval-mode BN into the conv weights (per-output-channel scale) and a
    bias; cast weights to bf16 for the MXU, keep biases in f32."""
    def fold(w_hwio, bn):
        gamma, beta, mean, var = bn
        scale = gamma / jnp.sqrt(var + _BN_EPS)
        wf = w_hwio * scale                                   # scale output channels
        bias = (beta - mean * scale).reshape(1, -1).astype(jnp.float32)
        return wf, bias

    cin = params["w1"].shape[2]
    c = params["w1"].shape[3]
    e = params["w3"].shape[3]

    w1, b1 = fold(params["w1"], params["bn1"])
    w2, b2 = fold(params["w2"], params["bn2"])
    w3, b3 = fold(params["w3"], params["bn3"])
    prepared = {
        "w1": w1.reshape(cin, c).astype(jnp.bfloat16), "b1": b1,
        "w2": w2.reshape(9, c, c).astype(jnp.bfloat16), "b2": b2,
        "w3": w3.reshape(c, e).astype(jnp.bfloat16), "b3": b3,
    }
    if "ws" in params:
        ws, bs = fold(params["ws"], params["bns"])
        prepared["ws"] = ws.reshape(cin, e).astype(jnp.bfloat16)
        prepared["bs"] = bs
    return prepared


# --------------------------------- forward -----------------------------------
def bottleneck_forward(x_nhwc, prepared, stride):
    N, H, W, Cin = x_nhwc.shape
    C = prepared["w1"].shape[1]
    E = prepared["w3"].shape[1]

    xb = x_nhwc.astype(jnp.bfloat16)

    # conv1 (1x1) + bn1 + relu : fused matmul, bf16 in, f32 accumulate, bf16 out
    h1 = fused_matmul(xb.reshape(-1, Cin), prepared["w1"], prepared["b1"],
                      relu=True, out_dtype=jnp.bfloat16)
    h1 = h1.reshape(N, H, W, C)

    # conv2 (3x3, stride, pad=1) + bn2 + relu : direct conv, no HBM im2col
    h2, Ho, Wo = conv3x3_bn_relu(h1, prepared["w2"], prepared["b2"], stride)
    h2 = h2.reshape(N * Ho * Wo, C)

    # conv3 (1x1) + bn3 + shortcut + relu : one fused kernel, bf16 output
    if "ws" in prepared:
        xs = xb[:, ::stride, ::stride, :].reshape(N * Ho * Wo, Cin)
        out = fused_matmul(h2, prepared["w3"], prepared["b3"],
                           proj=(xs, prepared["ws"], prepared["bs"]),
                           relu=True, out_dtype=jnp.bfloat16)
    else:
        res = xb.reshape(N * Ho * Wo, E)
        out = fused_matmul(h2, prepared["w3"], prepared["b3"],
                           residual=res, relu=True, out_dtype=jnp.bfloat16)
    return out.reshape(N, Ho, Wo, E)


# ----------------------------- pure-JAX reference ----------------------------
def reference_forward(x_nhwc, prepared, stride):
    """Same math (folded BN, bf16-rounded weights/activations) via lax.conv."""
    dn = ("NHWC", "HWIO", "NHWC")
    f32 = jnp.float32
    Cin = prepared["w1"].shape[0]
    C = prepared["w1"].shape[1]
    E = prepared["w3"].shape[1]

    xb = x_nhwc.astype(jnp.bfloat16).astype(f32)
    w1 = prepared["w1"].astype(f32).reshape(1, 1, Cin, C)
    w2 = prepared["w2"].astype(f32).reshape(3, 3, C, C)
    w3 = prepared["w3"].astype(f32).reshape(1, 1, C, E)

    h = lax.conv_general_dilated(xb, w1, (1, 1), "VALID", dimension_numbers=dn)
    h = jax.nn.relu(h + prepared["b1"].reshape(1, 1, 1, C))
    h = h.astype(jnp.bfloat16).astype(f32)
    h = lax.conv_general_dilated(h, w2, (stride, stride), [(1, 1), (1, 1)],
                                 dimension_numbers=dn)
    h = jax.nn.relu(h + prepared["b2"].reshape(1, 1, 1, C))
    h = h.astype(jnp.bfloat16).astype(f32)
    h = lax.conv_general_dilated(h, w3, (1, 1), "VALID", dimension_numbers=dn)
    h = h + prepared["b3"].reshape(1, 1, 1, E)
    if "ws" in prepared:
        ws = prepared["ws"].astype(f32).reshape(1, 1, Cin, E)
        sc = lax.conv_general_dilated(xb, ws, (stride, stride), "VALID",
                                      dimension_numbers=dn)
        sc = sc + prepared["bs"].reshape(1, 1, 1, E)
    else:
        sc = xb
    return jax.nn.relu(h + sc)


if __name__ == "__main__":
    key = jax.random.PRNGKey(0)
    kx, kp1, kp2 = jax.random.split(key, 3)

    fwd = jax.jit(bottleneck_forward, static_argnames=("stride",))

    # Case 1: projection shortcut (stride=2, in_channels != 4*channels)
    in_channels, channels, stride = 8, 4, 2
    x_nchw = jax.random.normal(kx, (2, in_channels, 16, 16), jnp.float32)  # PyTorch NCHW
    x_nhwc = jnp.transpose(x_nchw, (0, 2, 3, 1))
    prepared = prepare_params(make_params(kp1, in_channels, channels, stride))
    out = jax.block_until_ready(fwd(x_nhwc, prepared, stride=stride))
    ref = reference_forward(x_nhwc, prepared, stride)
    assert out.shape == (2, 8, 8, 16)
    assert jnp.allclose(out.astype(jnp.float32), ref, rtol=2e-2, atol=2e-2), \
        float(jnp.max(jnp.abs(out.astype(jnp.float32) - ref)))

    # Case 2: identity shortcut (stride=1, in_channels == 4*channels)
    in_channels2, channels2, stride2 = 16, 4, 1
    x2 = jax.random.normal(kx, (2, 8, 8, in_channels2), jnp.float32)  # NHWC
    prepared2 = prepare_params(make_params(kp2, in_channels2, channels2, stride2))
    out2 = jax.block_until_ready(fwd(x2, prepared2, stride=stride2))
    ref2 = reference_forward(x2, prepared2, stride2)
    assert out2.shape == (2, 8, 8, 16)
    assert jnp.allclose(out2.astype(jnp.float32), ref2, rtol=2e-2, atol=2e-2), \
        float(jnp.max(jnp.abs(out2.astype(jnp.float32) - ref2)))

    print("KERNEL_OK")
</pallas_src>

<mosaic_0001>
module attributes {stable_mosaic.version = 11 : i64} {
  func.func @_matmul_kernel(%arg0: i32, %arg1: memref<512x8xbf16, #tpu.memory_space<vmem>>, %arg2: memref<8x4xbf16, #tpu.memory_space<vmem>>, %arg3: memref<1x4xf32, #tpu.memory_space<vmem>>, %arg4: memref<512x4xbf16, #tpu.memory_space<vmem>>) attributes {dimension_semantics = [#tpu.dimension_semantics<parallel>], iteration_bounds = array<i64: 1>, scalar_prefetch = 0 : i64, scratch_operands = 0 : i64, tpu.core_type = #tpu.core_type<tc>, window_params = [{transform_indices = @transform_0, window_bounds = array<i64: 512, 8>}, {pipeline_mode = #tpu.pipeline_mode<synchronous>, transform_indices = @transform_1, window_bounds = array<i64: 8, 4>}, {pipeline_mode = #tpu.pipeline_mode<synchronous>, transform_indices = @transform_2, window_bounds = array<i64: 1, 4>}, {transform_indices = @transform_3, window_bounds = array<i64: 512, 4>}]} {
    %c0 = arith.constant 0 : index
    %c0_0 = arith.constant 0 : index
    %0 = vector.load %arg1[%c0, %c0_0] : memref<512x8xbf16, #tpu.memory_space<vmem>>, vector<512x8xbf16>
    %c0_1 = arith.constant 0 : index
    %c0_2 = arith.constant 0 : index
    %1 = vector.load %arg2[%c0_1, %c0_2] : memref<8x4xbf16, #tpu.memory_space<vmem>>, vector<8x4xbf16>
    %cst = arith.constant dense<0.000000e+00> : vector<512x4xf32>
    %2 = tpu.matmul %0, %1, %cst {dimension_numbers = #tpu.dot_dimension_numbers<[1], [0], [0], [1], [0, 0, 1, 1], [], []>} : vector<512x8xbf16>, vector<8x4xbf16>, vector<512x4xf32> -> vector<512x4xf32>
    %c0_3 = arith.constant 0 : index
    %c0_4 = arith.constant 0 : index
    %3 = vector.load %arg3[%c0_3, %c0_4] : memref<1x4xf32, #tpu.memory_space<vmem>>, vector<1x4xf32>
    %4 = vector.broadcast %3 : vector<1x4xf32> to vector<512x4xf32>
    %5 = arith.addf %2, %4 : vector<512x4xf32>
    %cst_5 = arith.constant 0.000000e+00 : f32
    %6 = vector.broadcast %cst_5 : f32 to vector<512x4xf32>
    %7 = arith.maximumf %5, %6 : vector<512x4xf32>
    %8 = arith.truncf %7 : vector<512x4xf32> to vector<512x4xbf16>
    %c0_6 = arith.constant 0 : index
    %c0_7 = arith.constant 0 : index
    %9 = vector.load %arg4[%c0_6, %c0_7] : memref<512x4xbf16, #tpu.memory_space<vmem>>, vector<512x4xbf16>
    tpu.vector_store %arg4[%c0_6, %c0_7], %8 {strides = array<i32>} : memref<512x4xbf16, #tpu.memory_space<vmem>>, vector<512x4xbf16>,
    return
  }
  func.func @transform_0(%arg0: i32) -> (i32, i32) {
    %c0_i32 = arith.constant 0 : i32
    %c0_i32_0 = arith.constant 0 : i32
    return %arg0, %c0_i32 : i32, i32
  }
  func.func @transform_1(%arg0: i32) -> (i32, i32) {
    %c0_i32 = arith.constant 0 : i32
    %c0_i32_0 = arith.constant 0 : i32
    %c0_i32_1 = arith.constant 0 : i32
    return %c0_i32, %c0_i32_0 : i32, i32
  }
  func.func @transform_2(%arg0: i32) -> (i32, i32) {
    %c0_i32 = arith.constant 0 : i32
    %c0_i32_0 = arith.constant 0 : i32
    %c0_i32_1 = arith.constant 0 : i32
    return %c0_i32, %c0_i32_0 : i32, i32
  }
  func.func @transform_3(%arg0: i32) -> (i32, i32) {
    %c0_i32 = arith.constant 0 : i32
    %c0_i32_0 = arith.constant 0 : i32
    return %arg0, %c0_i32 : i32, i32
  }
}

module attributes {stable_mosaic.version = 11 : i64} {
  func.func @_conv3x3_kernel(%arg0: i32, %arg1: i32, %arg2: memref<4x9x9x4xbf16, #tpu.memory_space<vmem>>, %arg3: memref<9x4x4xbf16, #tpu.memory_space<vmem>>, %arg4: memref<1x4xf32, #tpu.memory_space<vmem>>, %arg5: memref<1x64x4xbf16, #tpu.memory_space<vmem>>) attributes {dimension_semantics = [#tpu.dimension_semantics<parallel>, #tpu.dimension_semantics<parallel>], iteration_bounds = array<i64: 2, 1>, scalar_prefetch = 0 : i64, scratch_operands = 0 : i64, tpu.core_type = #tpu.core_type<tc>, window_params = [{transform_indices = @transform_0, window_bounds = array<i64: 4, 9, 9, 4>}, {pipeline_mode = #tpu.pipeline_mode<synchronous>, transform_indices = @transform_1, window_bounds = array<i64: 9, 4, 4>}, {pipeline_mode = #tpu.pipeline_mode<synchronous>, transform_indices = @transform_2, window_bounds = array<i64: 1, 4>}, {transform_indices = @transform_3, window_bounds = array<i64: 1, 64, 4>}]} {
    %c8_i32 = arith.constant 8 : i32
    %0 = arith.muli %arg1, %c8_i32 : i32
    %c0_i32 = arith.constant 0 : i32
    %1 = arith.addi %0, %c0_i32 : i32
    %c0 = arith.constant 0 : index
    %2 = arith.index_cast %1 : i32 to index
    %c0_0 = arith.constant 0 : index
    %c0_1 = arith.constant 0 : index
    %3 = vector.load %arg2[%c0, %2, %c0_0, %c0_1] : memref<4x9x9x4xbf16, #tpu.memory_space<vmem>>, vector<1x8x8x4xbf16>
    %4 = vector.shape_cast %3 : vector<1x8x8x4xbf16> to vector<8x8x4xbf16>
    %5 = vector.shape_cast %4 : vector<8x8x4xbf16> to vector<64x4xbf16>
    %c0_i32_2 = arith.constant 0 : i32
    %6 = arith.addi %0, %c0_i32_2 : i32
    %c1 = arith.constant 1 : index
    %7 = arith.index_cast %6 : i32 to index
    %c0_3 = arith.constant 0 : index
    %c0_4 = arith.constant 0 : index
    %8 = vector.load %arg2[%c1, %7, %c0_3, %c0_4] : memref<4x9x9x4xbf16, #tpu.memory_space<vmem>>, vector<1x8x8x4xbf16>
    %9 = vector.shape_cast %8 : vector<1x8x8x4xbf16> to vector<8x8x4xbf16>
    %10 = vector.shape_cast %9 : vector<8x8x4xbf16> to vector<64x4xbf16>
    %c0_i32_5 = arith.constant 0 : i32
    %11 = arith.addi %0, %c0_i32_5 : i32
    %c0_6 = arith.constant 0 : index
    %12 = arith.index_cast %11 : i32 to index
    %c1_7 = arith.constant 1 : index
    %c0_8 = arith.constant 0 : index
    %13 = vector.load %arg2[%c0_6, %12, %c1_7, %c0_8] : memref<4x9x9x4xbf16, #tpu.memory_space<vmem>>, vector<1x8x8x4xbf16>
    %14 = vector.shape_cast %13 : vector<1x8x8x4xbf16> to vector<8x8x4xbf16>
    %15 = vector.shape_cast %14 : vector<8x8x4xbf16> to vector<64x4xbf16>
    %c0_i32_9 = arith.constant 0 : i32
    %16 = arith.addi %0, %c0_i32_9 : i32
    %c2 = arith.constant 2 : index
    %17 = arith.index_cast %16 : i32 to index
    %c0_10 = arith.constant 0 : index
    %c0_11 = arith.constant 0 : index
    %18 = vector.load %arg2[%c2, %17, %c0_10, %c0_11] : memref<4x9x9x4xbf16, #tpu.memory_space<vmem>>, vector<1x8x8x4xbf16>
    %19 = vector.shape_cast %18 : vector<1x8x8x4xbf16> to vector<8x8x4xbf16>
    %20 = vector.shape_cast %19 : vector<8x8x4xbf16> to vector<64x4xbf16>
    %c0_i32_12 = arith.constant 0 : i32
    %21 = arith.addi %0, %c0_i32_12 : i32
    %c3 = arith.constant 3 : index
    %22 = arith.index_cast %21 : i32 to index
    %c0_13 = arith.constant 0 : index
    %c0_14 = arith.constant 0 : index
    %23 = vector.load %arg2[%c3, %22, %c0_13, %c0_14] : memref<4x9x9x4xbf16, #tpu.memory_space<vmem>>, vector<1x8x8x4xbf16>
    %24 = vector.shape_cast %23 : vector<1x8x8x4xbf16> to vector<8x8x4xbf16>
    %25 = vector.shape_cast %24 : vector<8x8x4xbf16> to vector<64x4xbf16>
    %c0_i32_15 = arith.constant 0 : i32
    %26 = arith.addi %0, %c0_i32_15 : i32
    %c2_16 = arith.constant 2 : index
    %27 = arith.index_cast %26 : i32 to index
    %c1_17 = arith.constant 1 : index
    %c0_18 = arith.constant 0 : index
    %28 = vector.load %arg2[%c2_16, %27, %c1_17, %c0_18] : memref<4x9x9x4xbf16, #tpu.memory_space<vmem>>, vector<1x8x8x4xbf16>
    %29 = vector.shape_cast %28 : vector<1x8x8x4xbf16> to vector<8x8x4xbf16>
    %30 = vector.shape_cast %29 : vector<8x8x4xbf16> to vector<64x4xbf16>
    %c1_i32 = arith.constant 1 : i32
    %31 = arith.addi %0, %c1_i32 : i32
    %c0_19 = arith.constant 0 : index
    %32 = arith.index_cast %31 : i32 to index
    %c0_20 = arith.constant 0 : index
    %c0_21 = arith.constant 0 : index
    %33 = vector.load %arg2[%c0_19, %32, %c0_20, %c0_21] : memref<4x9x9x4xbf16, #tpu.memory_space<vmem>>, vector<1x8x8x4xbf16>
    %34 = vector.shape_cast %33 : vector<1x8x8x4xbf16> to vector<8x8x4xbf16>
    %35 = vector.shape_cast %34 : vector<8x8x4xbf16> to vector<64x4xbf16>
    %c1_i32_22 = arith.constant 1 : i32
    %36 = arith.addi %0, %c1_i32_22 : i32
    %c1_23 = arith.constant 1 : index
    %37 = arith.index_cast %36 : i32 to index
    %c0_24 = arith.constant 0 : index
    %c0_25 = arith.constant 0 : index
    %38 = vector.load %arg2[%c1_23, %37, %c0_24, %c0_25] : memref<4x9x9x4xbf16, #tpu.memory_space<vmem>>, vector<1x8x8x4xbf16>
    %39 = vector.shape_cast %38 : vector<1x8x8x4xbf16> to vector<8x8x4xbf16>
    %40 = vector.shape_cast %39 : vector<8x8x4xbf16> to vector<64x4xbf16>
    %c1_i32_26 = arith.constant 1 : i32
    %41 = arith.addi %0, %c1_i32_26 : i32
    %c0_27 = arith.constant 0 : index
    %42 = arith.index_cast %41 : i32 to index
    %c1_28 = arith.constant 1 : index
    %c0_29 = arith.constant 0 : index
    %43 = vector.load %arg2[%c0_27, %42, %c1_28, %c0_29] : memref<4x9x9x4xbf16, #tpu.memory_space<vmem>>, vector<1x8x8x4xbf16>
    %44 = vector.shape_cast %43 : vector<1x8x8x4xbf16> to vector<8x8x4xbf16>
    %45 = vector.shape_cast %44 : vector<8x8x4xbf16> to vector<64x4xbf16>
    %cst = arith.constant 0.000000e+00 : f32
    %46 = vector.broadcast %cst : f32 to vector<64x4xf32>
    %c0_30 = arith.constant 0 : index
    %c0_31 = arith.constant 0 : index
    %c0_32 = arith.constant 0 : index
    %47 = vector.load %arg3[%c0_30, %c0_31, %c0_32] : memref<9x4x4xbf16, #tpu.memory_space<vmem>>, vector<1x4x4xbf16>
    %48 = vector.shape_cast %47 : vector<1x4x4xbf16> to vector<4x4xbf16>
    %cst_33 = arith.constant dense<0.000000e+00> : vector<64x4xf32>
    %49 = tpu.matmul %5, %48, %cst_33 {dimension_numbers = #tpu.dot_dimension_numbers<[1], [0], [0], [1], [0, 0, 1, 1], [], []>} : vector<64x4xbf16>, vector<4x4xbf16>, vector<64x4xf32> -> vector<64x4xf32>
    %50 = arith.addf %46, %49 : vector<64x4xf32>
    %c1_34 = arith.constant 1 : index
    %c0_35 = arith.constant 0 : index
    %c0_36 = arith.constant 0 : index
    %51 = vector.load %arg3[%c1_34, %c0_35, %c0_36] : memref<9x4x4xbf16, #tpu.memory_space<vmem>>, vector<1x4x4xbf16>
    %52 = vector.shape_cast %51 : vector<1x4x4xbf16> to vector<4x4xbf16>
    %cst_37 = arith.constant dense<0.000000e+00> : vector<64x4xf32>
    %53 = tpu.matmul %10, %52, %cst_37 {dimension_numbers = #tpu.dot_dimension_numbers<[1], [0], [0], [1], [0, 0, 1, 1], [], []>} : vector<64x4xbf16>, vector<4x4xbf16>, vector<64x4xf32> -> vector<64x4xf32>
    %54 = arith.addf %50, %53 : vector<64x4xf32>
    %c2_38 = arith.constant 2 : index
    %c0_39 = arith.constant 0 : index
    %c0_40 = arith.constant 0 : index
    %55 = vector.load %arg3[%c2_38, %c0_39, %c0_40] : memref<9x4x4xbf16, #tpu.memory_space<vmem>>, vector<1x4x4xbf16>
    %56 = vector.shape_cast %55 : vector<1x4x4xbf16> to vector<4x4xbf16>
    %cst_41 = arith.constant dense<0.000000e+00> : vector<64x4xf32>
    %57 = tpu.matmul %15, %56, %cst_41 {dimension_numbers = #tpu.dot_dimension_numbers<[1], [0], [0], [1], [0, 0, 1, 1], [], []>} : vector<64x4xbf16>, vector<4x4xbf16>, vector<64x4xf32> -> vector<64x4xf32>
    %58 = arith.addf %54, %57 : vector<64x4xf32>
    %c3_42 = arith.constant 3 : index
    %c0_43 = arith.constant 0 : index
    %c0_44 = arith.constant 0 : index
    %59 = vector.load %arg3[%c3_42, %c0_43, %c0_44] : memref<9x4x4xbf16, #tpu.memory_space<vmem>>, vector<1x4x4xbf16>
    %60 = vector.shape_cast %59 : vector<1x4x4xbf16> to vector<4x4xbf16>
    %cst_45 = arith.constant dense<0.000000e+00> : vector<64x4xf32>
    %61 = tpu.matmul %20, %60, %cst_45 {dimension_numbers = #tpu.dot_dimension_numbers<[1], [0], [0], [1], [0, 0, 1, 1], [], []>} : vector<64x4xbf16>, vector<4x4xbf16>, vector<64x4xf32> -> vector<64x4xf32>
    %62 = arith.addf %58, %61 : vector<64x4xf32>
    %c4 = arith.constant 4 : index
    %c0_46 = arith.constant 0 : index
    %c0_47 = arith.constant 0 : index
    %63 = vector.load %arg3[%c4, %c0_46, %c0_47] : memref<9x4x4xbf16, #tpu.memory_space<vmem>>, vector<1x4x4xbf16>
    %64 = vector.shape_cast %63 : vector<1x4x4xbf16> to vector<4x4xbf16>
    %cst_48 = arith.constant dense<0.000000e+00> : vector<64x4xf32>
    %65 = tpu.matmul %25, %64, %cst_48 {dimension_numbers = #tpu.dot_dimension_numbers<[1], [0], [0], [1], [0, 0, 1, 1], [], []>} : vector<64x4xbf16>, vector<4x4xbf16>, vector<64x4xf32> -> vector<64x4xf32>
    %66 = arith.addf %62, %65 : vector<64x4xf32>
    %c5 = arith.constant 5 : index
    %c0_49 = arith.constant 0 : index
    %c0_50 = arith.constant 0 : index
    %67 = vector.load %arg3[%c5, %c0_49, %c0_50] : memref<9x4x4xbf16, #tpu.memory_space<vmem>>, vector<1x4x4xbf16>
    %68 = vector.shape_cast %67 : vector<1x4x4xbf16> to vector<4x4xbf16>
    %cst_51 = arith.constant dense<0.000000e+00> : vector<64x4xf32>
    %69 = tpu.matmul %30, %68, %cst_51 {dimension_numbers = #tpu.dot_dimension_numbers<[1], [0], [0], [1], [0, 0, 1, 1], [], []>} : vector<64x4xbf16>, vector<4x4xbf16>, vector<64x4xf32> -> vector<64x4xf32>
    %70 = arith.addf %66, %69 : vector<64x4xf32>
    %c6 = arith.constant 6 : index
    %c0_52 = arith.constant 0 : index
    %c0_53 = arith.constant 0 : index
    %71 = vector.load %arg3[%c6, %c0_52, %c0_53] : memref<9x4x4xbf16, #tpu.memory_space<vmem>>, vector<1x4x4xbf16>
    %72 = vector.shape_cast %71 : vector<1x4x4xbf16> to vector<4x4xbf16>
    %cst_54 = arith.constant dense<0.000000e+00> : vector<64x4xf32>
    %73 = tpu.matmul %35, %72, %cst_54 {dimension_numbers = #tpu.dot_dimension_numbers<[1], [0], [0], [1], [0, 0, 1, 1], [], []>} : vector<64x4xbf16>, vector<4x4xbf16>, vector<64x4xf32> -> vector<64x4xf32>
    %74 = arith.addf %70, %73 : vector<64x4xf32>
    %c7 = arith.constant 7 : index
    %c0_55 = arith.constant 0 : index
    %c0_56 = arith.constant 0 : index
    %75 = vector.load %arg3[%c7, %c0_55, %c0_56] : memref<9x4x4xbf16, #tpu.memory_space<vmem>>, vector<1x4x4xbf16>
    %76 = vector.shape_cast %75 : vector<1x4x4xbf16> to vector<4x4xbf16>
    %cst_57 = arith.constant dense<0.000000e+00> : vector<64x4xf32>
    %77 = tpu.matmul %40, %76, %cst_57 {dimension_numbers = #tpu.dot_dimension_numbers<[1], [0], [0], [1], [0, 0, 1, 1], [], []>} : vector<64x4xbf16>, vector<4x4xbf16>, vector<64x4xf32> -> vector<64x4xf32>
    %78 = arith.addf %74, %77 : vector<64x4xf32>
    %c8 = arith.constant 8 : index
    %c0_58 = arith.constant 0 : index
    %c0_59 = arith.constant 0 : index
    %79 = vector.load %arg3[%c8, %c0_58, %c0_59] : memref<9x4x4xbf16, #tpu.memory_space<vmem>>, vector<1x4x4xbf16>
    %80 = vector.shape_cast %79 : vector<1x4x4xbf16> to vector<4x4xbf16>
    %cst_60 = arith.constant dense<0.000000e+00> : vector<64x4xf32>
    %81 = tpu.matmul %45, %80, %cst_60 {dimension_numbers = #tpu.dot_dimension_numbers<[1], [0], [0], [1], [0, 0, 1, 1], [], []>} : vector<64x4xbf16>, vector<4x4xbf16>, vector<64x4xf32> -> vector<64x4xf32>
    %82 = arith.addf %78, %81 : vector<64x4xf32>
    %c0_61 = arith.constant 0 : index
    %c0_62 = arith.constant 0 : index
    %83 = vector.load %arg4[%c0_61, %c0_62] : memref<1x4xf32, #tpu.memory_space<vmem>>, vector<1x4xf32>
    %84 = vector.broadcast %83 : vector<1x4xf32> to vector<64x4xf32>
    %85 = arith.addf %82, %84 : vector<64x4xf32>
    %cst_63 = arith.constant 0.000000e+00 : f32
    %86 = vector.broadcast %cst_63 : f32 to vector<64x4xf32>
    %87 = arith.maximumf %85, %86 : vector<64x4xf32>
    %88 = arith.truncf %87 : vector<64x4xf32> to vector<64x4xbf16>
    %c0_64 = arith.constant 0 : index
    %c0_65 = arith.constant 0 : index
    %c0_66 = arith.constant 0 : index
    %89 = vector.load %arg5[%c0_64, %c0_65, %c0_66] : memref<1x64x4xbf16, #tpu.memory_space<vmem>>, vector<1x64x4xbf16>
    %90 = vector.shape_cast %89 : vector<1x64x4xbf16> to vector<64x4xbf16>
    %91 = vector.shape_cast %88 : vector<64x4xbf16> to vector<1x64x4xbf16>
    tpu.vector_store %arg5[%c0_64, %c0_65, %c0_66], %91 {strides = array<i32>} : memref<1x64x4xbf16, #tpu.memory_space<vmem>>, vector<1x64x4xbf16>,
    return
  }
  func.func @transform_0(%arg0: i32, %arg1: i32) -> (i32, i32, i32, i32) {
    %c0_i32 = arith.constant 0 : i32
    %c0_i32_0 = arith.constant 0 : i32
    %c0_i32_1 = arith.constant 0 : i32
    %c0_i32_2 = arith.constant 0 : i32
    return %arg0, %c0_i32, %c0_i32_0, %c0_i32_1 : i32, i32, i32, i32
  }
  func.func @transform_1(%arg0: i32, %arg1: i32) -> (i32, i32, i32) {
    %c0_i32 = arith.constant 0 : i32
    %c0_i32_0 = arith.constant 0 : i32
    %c0_i32_1 = arith.constant 0 : i32
    %c0_i32_2 = arith.constant 0 : i32
    return %c0_i32, %c0_i32_0, %c0_i32_1 : i32, i32, i32
  }
  func.func @transform_2(%arg0: i32, %arg1: i32) -> (i32, i32) {
    %c0_i32 = arith.constant 0 : i32
    %c0_i32_0 = arith.constant 0 : i32
    %c0_i32_1 = arith.constant 0 : i32
    return %c0_i32, %c0_i32_0 : i32, i32
  }
  func.func @transform_3(%arg0: i32, %arg1: i32) -> (i32, i32, i32) {
    %c0_i32 = arith.constant 0 : i32
    %c0_i32_0 = arith.constant 0 : i32
    return %arg0, %arg1, %c0_i32 : i32, i32, i32
  }
}

module attributes {stable_mosaic.version = 11 : i64} {
  func.func @_matmul_kernel(%arg0: i32, %arg1: memref<128x4xbf16, #tpu.memory_space<vmem>>, %arg2: memref<4x16xbf16, #tpu.memory_space<vmem>>, %arg3: memref<1x16xf32, #tpu.memory_space<vmem>>, %arg4: memref<128x8xbf16, #tpu.memory_space<vmem>>, %arg5: memref<8x16xbf16, #tpu.memory_space<vmem>>, %arg6: memref<1x16xf32, #tpu.memory_space<vmem>>, %arg7: memref<128x16xbf16, #tpu.memory_space<vmem>>) attributes {dimension_semantics = [#tpu.dimension_semantics<parallel>], iteration_bounds = array<i64: 1>, scalar_prefetch = 0 : i64, scratch_operands = 0 : i64, tpu.core_type = #tpu.core_type<tc>, window_params = [{transform_indices = @transform_0, window_bounds = array<i64: 128, 4>}, {pipeline_mode = #tpu.pipeline_mode<synchronous>, transform_indices = @transform_1, window_bounds = array<i64: 4, 16>}, {pipeline_mode = #tpu.pipeline_mode<synchronous>, transform_indices = @transform_2, window_bounds = array<i64: 1, 16>}, {transform_indices = @transform_3, window_bounds = array<i64: 128, 8>}, {pipeline_mode = #tpu.pipeline_mode<synchronous>, transform_indices = @transform_4, window_bounds = array<i64: 8, 16>}, {pipeline_mode = #tpu.pipeline_mode<synchronous>, transform_indices = @transform_5, window_bounds = array<i64: 1, 16>}, {transform_indices = @transform_6, window_bounds = array<i64: 128, 16>}]} {
    %c0 = arith.constant 0 : index
    %c0_0 = arith.constant 0 : index
    %0 = vector.load %arg1[%c0, %c0_0] : memref<128x4xbf16, #tpu.memory_space<vmem>>, vector<128x4xbf16>
    %c0_1 = arith.constant 0 : index
    %c0_2 = arith.constant 0 : index
    %1 = vector.load %arg2[%c0_1, %c0_2] : memref<4x16xbf16, #tpu.memory_space<vmem>>, vector<4x16xbf16>
    %cst = arith.constant dense<0.000000e+00> : vector<128x16xf32>
    %2 = tpu.matmul %0, %1, %cst {dimension_numbers = #tpu.dot_dimension_numbers<[1], [0], [0], [1], [0, 0, 1, 1], [], []>} : vector<128x4xbf16>, vector<4x16xbf16>, vector<128x16xf32> -> vector<128x16xf32>
    %c0_3 = arith.constant 0 : index
    %c0_4 = arith.constant 0 : index
    %3 = vector.load %arg3[%c0_3, %c0_4] : memref<1x16xf32, #tpu.memory_space<vmem>>, vector<1x16xf32>
    %4 = vector.broadcast %3 : vector<1x16xf32> to vector<128x16xf32>
    %5 = arith.addf %2, %4 : vector<128x16xf32>
    %c0_5 = arith.constant 0 : index
    %c0_6 = arith.constant 0 : index
    %6 = vector.load %arg4[%c0_5, %c0_6] : memref<128x8xbf16, #tpu.memory_space<vmem>>, vector<128x8xbf16>
    %c0_7 = arith.constant 0 : index
    %c0_8 = arith.constant 0 : index
    %7 = vector.load %arg5[%c0_7, %c0_8] : memref<8x16xbf16, #tpu.memory_space<vmem>>, vector<8x16xbf16>
    %cst_9 = arith.constant dense<0.000000e+00> : vector<128x16xf32>
    %8 = tpu.matmul %6, %7, %cst_9 {dimension_numbers = #tpu.dot_dimension_numbers<[1], [0], [0], [1], [0, 0, 1, 1], [], []>} : vector<128x8xbf16>, vector<8x16xbf16>, vector<128x16xf32> -> vector<128x16xf32>
    %9 = arith.addf %5, %8 : vector<128x16xf32>
    %c0_10 = arith.constant 0 : index
    %c0_11 = arith.constant 0 : index
    %10 = vector.load %arg6[%c0_10, %c0_11] : memref<1x16xf32, #tpu.memory_space<vmem>>, vector<1x16xf32>
    %11 = vector.broadcast %10 : vector<1x16xf32> to vector<128x16xf32>
    %12 = arith.addf %9, %11 : vector<128x16xf32>
    %cst_12 = arith.constant 0.000000e+00 : f32
    %13 = vector.broadcast %cst_12 : f32 to vector<128x16xf32>
    %14 = arith.maximumf %12, %13 : vector<128x16xf32>
    %15 = arith.truncf %14 : vector<128x16xf32> to vector<128x16xbf16>
    %c0_13 = arith.constant 0 : index
    %c0_14 = arith.constant 0 : index
    %16 = vector.load %arg7[%c0_13, %c0_14] : memref<128x16xbf16, #tpu.memory_space<vmem>>, vector<128x16xbf16>
    tpu.vector_store %arg7[%c0_13, %c0_14], %15 {strides = array<i32>} : memref<128x16xbf16, #tpu.memory_space<vmem>>, vector<128x16xbf16>,
    return
  }
  func.func @transform_0(%arg0: i32) -> (i32, i32) {
    %c0_i32 = arith.constant 0 : i32
    %c0_i32_0 = arith.constant 0 : i32
    return %arg0, %c0_i32 : i32, i32
  }
  func.func @transform_1(%arg0: i32) -> (i32, i32) {
    %c0_i32 = arith.constant 0 : i32
    %c0_i32_0 = arith.constant 0 : i32
    %c0_i32_1 = arith.constant 0 : i32
    return %c0_i32, %c0_i32_0 : i32, i32
  }
  func.func @transform_2(%arg0: i32) -> (i32, i32) {
    %c0_i32 = arith.constant 0 : i32
    %c0_i32_0 = arith.constant 0 : i32
    %c0_i32_1 = arith.constant 0 : i32
    return %c0_i32, %c0_i32_0 : i32, i32
  }
  func.func @transform_3(%arg0: i32) -> (i32, i32) {
    %c0_i32 = arith.constant 0 : i32
    %c0_i32_0 = arith.constant 0 : i32
    return %arg0, %c0_i32 : i32, i32
  }
  func.func @transform_4(%arg0: i32) -> (i32, i32) {
    %c0_i32 = arith.constant 0 : i32
    %c0_i32_0 = arith.constant 0 : i32
    %c0_i32_1 = arith.constant 0 : i32
    return %c0_i32, %c0_i32_0 : i32, i32
  }
  func.func @transform_5(%arg0: i32) -> (i32, i32) {
    %c0_i32 = arith.constant 0 : i32
    %c0_i32_0 = arith.constant 0 : i32
    %c0_i32_1 = arith.constant 0 : i32
    return %c0_i32, %c0_i32_0 : i32, i32
  }
  func.func @transform_6(%arg0: i32) -> (i32, i32) {
    %c0_i32 = arith.constant 0 : i32
    %c0_i32_0 = arith.constant 0 : i32
    return %arg0, %c0_i32 : i32, i32
  }
}

</mosaic_0001>

<llo_original>
// kernel: bottleneck_forward.3
$region0: #{bottleneck_forward.3}
  #allocation0 [shape = 'u32[]', space=smem, size = 0x4, offset = 0x4, fixed_abs, tag = 'smem constant byte address 0x4 - core index']
  #allocation1 [shape = 'u32[72,128]{1,0:T(1,128)}', space=vmem, size = 0x9000, scoped, tag = 'internal scratch']
  %s0 = inlined_call_operand.vmem [shape: bf16[512,8], index: 0, kind: input, shape index: {}]
  %s1 = inlined_call_operand.vmem [shape: bf16[8,4], index: 1, kind: input, shape index: {}]
  %s2 = inlined_call_operand.vmem [shape: f32[1,4], index: 2, kind: input, shape index: {}]
  %s3 = inlined_call_operand.vmem [shape: bf16[512,4], index: 3, kind: output, shape index: {}]
  %s4 = sld [smem:[#allocation0]]
  $region22: #{bottleneck_forward.3} parent=0
    _
  %s6 = ssub.s32 1, %s4
  %s7 = scalar_select 0, %s6, %s4
  // Predicated region
  $region2: #{bottleneck_forward.3} parent=0 // pred_check
    _
  $region3: #{bottleneck_forward.3} parent=0 // pred_check_branch
    %9 = sbr.rel (0) target = $region5
  $region4: #{bottleneck_forward.3} parent=0 // pred_region
    _
  $region5: #{bottleneck_forward.3} parent=0 // pred_fallthru
    _
  // Predicated region
  $region6: #{bottleneck_forward.3} parent=0 // pred_check
    _
  $region7: #{bottleneck_forward.3} parent=0 // pred_check_branch
    %11 = sbr.rel (0) target = $region9
  $region8: #{bottleneck_forward.3} parent=0 // pred_region
    _
  $region9: #{bottleneck_forward.3} parent=0 // pred_fallthru
    _
  // Predicated region
  $region10: #{bottleneck_forward.3} parent=0 // pred_check
    _
  $region11: #{bottleneck_forward.3} parent=0 // pred_check_branch
    %13 = sbr.rel (0) target = $region13
  $region12: #{bottleneck_forward.3} parent=0 // pred_region
    _
  $region13: #{bottleneck_forward.3} parent=0 // pred_fallthru
    _
  %v15 = vld [vmem:[%s0] sm:$0xf]
  %v16 = vld [vmem:[%s0 + $0x4] sm:$0xf]
  %v17 = vld [vmem:[%s0 + $0x8] sm:$0xf]
  %v18 = vld [vmem:[%s0 + $0xc] sm:$0xf]
  %v19 = vld [vmem:[%s0 + $0x10] sm:$0xf]
  %v20 = vld [vmem:[%s0 + $0x14] sm:$0xf]
  %v21 = vld [vmem:[%s0 + $0x18] sm:$0xf]
  %v22 = vld [vmem:[%s0 + $0x1c] sm:$0xf]
  %v23 = vld [vmem:[%s0 + $0x20] sm:$0xf]
  %v24 = vld [vmem:[%s0 + $0x24] sm:$0xf]
  %v25 = vld [vmem:[%s0 + $0x28] sm:$0xf]
  %v26 = vld [vmem:[%s0 + $0x2c] sm:$0xf]
  %v27 = vld [vmem:[%s0 + $0x30] sm:$0xf]
  %v28 = vld [vmem:[%s0 + $0x34] sm:$0xf]
  %v29 = vld [vmem:[%s0 + $0x38] sm:$0xf]
  %v30 = vld [vmem:[%s0 + $0x3c] sm:$0xf]
  %v31 = vld [vmem:[%s0 + $0x40] sm:$0xf]
  %v32 = vld [vmem:[%s0 + $0x44] sm:$0xf]
  %v33 = vld [vmem:[%s0 + $0x48] sm:$0xf]
  %v34 = vld [vmem:[%s0 + $0x4c] sm:$0xf]
  %v35 = vld [vmem:[%s0 + $0x50] sm:$0xf]
  %v36 = vld [vmem:[%s0 + $0x54] sm:$0xf]
  %v37 = vld [vmem:[%s0 + $0x58] sm:$0xf]
  %v38 = vld [vmem:[%s0 + $0x5c] sm:$0xf]
  %v39 = vld [vmem:[%s0 + $0x60] sm:$0xf]
  %v40 = vld [vmem:[%s0 + $0x64] sm:$0xf]
  %v41 = vld [vmem:[%s0 + $0x68] sm:$0xf]
  %v42 = vld [vmem:[%s0 + $0x6c] sm:$0xf]
  %v43 = vld [vmem:[%s0 + $0x70] sm:$0xf]
  %v44 = vld [vmem:[%s0 + $0x74] sm:$0xf]
  %v45 = vld [vmem:[%s0 + $0x78] sm:$0xf]
  %v46 = vld [vmem:[%s0 + $0x7c] sm:$0xf]
  %v47 = vld [vmem:[%s0 + $0x80] sm:$0xf]
  %v48 = vld [vmem:[%s0 + $0x84] sm:$0xf]
  %v49 = vld [vmem:[%s0 + $0x88] sm:$0xf]
  %v50 = vld [vmem:[%s0 + $0x8c] sm:$0xf]
  %v51 = vld [vmem:[%s0 + $0x90] sm:$0xf]
  %v52 = vld [vmem:[%s0 + $0x94] sm:$0xf]
  %v53 = vld [vmem:[%s0 + $0x98] sm:$0xf]
  %v54 = vld [vmem:[%s0 + $0x9c] sm:$0xf]
  %v55 = vld [vmem:[%s0 + $0xa0] sm:$0xf]
  %v56 = vld [vmem:[%s0 + $0xa4] sm:$0xf]
  %v57 = vld [vmem:[%s0 + $0xa8] sm:$0xf]
  %v58 = vld [vmem:[%s0 + $0xac] sm:$0xf]
  %v59 = vld [vmem:[%s0 + $0xb0] sm:$0xf]
  %v60 = vld [vmem:[%s0 + $0xb4] sm:$0xf]
  %v61 = vld [vmem:[%s0 + $0xb8] sm:$0xf]
  %v62 = vld [vmem:[%s0 + $0xbc] sm:$0xf]
  %v63 = vld [vmem:[%s0 + $0xc0] sm:$0xf]
  %v64 = vld [vmem:[%s0 + $0xc4] sm:$0xf]
  %v65 = vld [vmem:[%s0 + $0xc8] sm:$0xf]
  %v66 = vld [vmem:[%s0 + $0xcc] sm:$0xf]
  %v67 = vld [vmem:[%s0 + $0xd0] sm:$0xf]
  %v68 = vld [vmem:[%s0 + $0xd4] sm:$0xf]
  %v69 = vld [vmem:[%s0 + $0xd8] sm:$0xf]
  %v70 = vld [vmem:[%s0 + $0xdc] sm:$0xf]
  %v71 = vld [vmem:[%s0 + $0xe0] sm:$0xf]
  %v72 = vld [vmem:[%s0 + $0xe4] sm:$0xf]
  %v73 = vld [vmem:[%s0 + $0xe8] sm:$0xf]
  %v74 = vld [vmem:[%s0 + $0xec] sm:$0xf]
  %v75 = vld [vmem:[%s0 + $0xf0] sm:$0xf]
  %v76 = vld [vmem:[%s0 + $0xf4] sm:$0xf]
  %v77 = vld [vmem:[%s0 + $0xf8] sm:$0xf]
  %v78 = vld [vmem:[%s0 + $0xfc] sm:$0xf]
  %v79 = vld [vmem:[%s1] sm:$0xf]
  %v80 = vld [vmem:[%s2] sm:$0x1]
  %v82 = vperm.slane %v80, 0
  %v148 = vunpack.c.l.b16 %v15
  %v149 = vunpack.c.l.b16 %v16
  %v150 = vunpack.c.l.b16 %v17
  %v151 = vunpack.c.l.b16 %v18
  %v152 = vunpack.c.l.b16 %v19
  %v153 = vunpack.c.l.b16 %v20
  %v154 = vunpack.c.l.b16 %v21
  %v155 = vunpack.c.l.b16 %v22
  %v156 = vunpack.c.l.b16 %v23
  %v157 = vunpack.c.l.b16 %v24
  %v158 = vunpack.c.l.b16 %v25
  %v159 = vunpack.c.l.b16 %v26
  %v160 = vunpack.c.l.b16 %v27
  %v161 = vunpack.c.l.b16 %v28
  %v162 = vunpack.c.l.b16 %v29
  %v163 = vunpack.c.l.b16 %v30
  %v164 = vunpack.c.l.b16 %v31
  %v165 = vunpack.c.l.b16 %v32
  %v166 = vunpack.c.l.b16 %v33
  %v167 = vunpack.c.l.b16 %v34
  %v168 = vunpack.c.l.b16 %v35
  %v169 = vunpack.c.l.b16 %v36
  %v170 = vunpack.c.l.b16 %v37
  %v171 = vunpack.c.l.b16 %v38
  %v172 = vunpack.c.l.b16 %v39
  %v173 = vunpack.c.l.b16 %v40
  %v174 = vunpack.c.l.b16 %v41
  %v175 = vunpack.c.l.b16 %v42
  %v176 = vunpack.c.l.b16 %v43
  %v177 = vunpack.c.l.b16 %v44
  %v178 = vunpack.c.l.b16 %v45
  %v179 = vunpack.c.l.b16 %v46
  %v180 = vunpack.c.l.b16 %v47
  %v181 = vunpack.c.l.b16 %v48
  %v182 = vunpack.c.l.b16 %v49
  %v183 = vunpack.c.l.b16 %v50
  %v184 = vunpack.c.l.b16 %v51
  %v185 = vunpack.c.l.b16 %v52
  %v186 = vunpack.c.l.b16 %v53
  %v187 = vunpack.c.l.b16 %v54
  %v188 = vunpack.c.l.b16 %v55
  %v189 = vunpack.c.l.b16 %v56
  %v190 = vunpack.c.l.b16 %v57
  %v191 = vunpack.c.l.b16 %v58
  %v192 = vunpack.c.l.b16 %v59
  %v193 = vunpack.c.l.b16 %v60
  %v194 = vunpack.c.l.b16 %v61
  %v195 = vunpack.c.l.b16 %v62
  %v196 = vunpack.c.l.b16 %v63
  %v197 = vunpack.c.l.b16 %v64
  %v198 = vunpack.c.l.b16 %v65
  %v199 = vunpack.c.l.b16 %v66
  %v200 = vunpack.c.l.b16 %v67
  %v201 = vunpack.c.l.b16 %v68
  %v202 = vunpack.c.l.b16 %v69
  %v203 = vunpack.c.l.b16 %v70
  %v204 = vunpack.c.l.b16 %v71
  %v205 = vunpack.c.l.b16 %v72
  %v206 = vunpack.c.l.b16 %v73
  %v207 = vunpack.c.l.b16 %v74
  %v208 = vunpack.c.l.b16 %v75
  %v209 = vunpack.c.l.b16 %v76
  %v210 = vunpack.c.l.b16 %v77
  %v211 = vunpack.c.l.b16 %v78
  %v212 = vpack.c.b16 %v149, %v148
  %v213 = vpack.c.b16 %v151, %v150
  %v214 = vpack.c.b16 %v153, %v152
  %v215 = vpack.c.b16 %v155, %v154
  %v216 = vpack.c.b16 %v157, %v156
  %v217 = vpack.c.b16 %v159, %v158
  %v218 = vpack.c.b16 %v161, %v160
  %v219 = vpack.c.b16 %v163, %v162
  %v220 = vpack.c.b16 %v165, %v164
  %v221 = vpack.c.b16 %v167, %v166
  %v222 = vpack.c.b16 %v169, %v168
  %v223 = vpack.c.b16 %v171, %v170
  %v224 = vpack.c.b16 %v173, %v172
  %v225 = vpack.c.b16 %v175, %v174
  %v226 = vpack.c.b16 %v177, %v176
  %v227 = vpack.c.b16 %v179, %v178
  %v228 = vpack.c.b16 %v181, %v180
  %v229 = vpack.c.b16 %v183, %v182
  %v230 = vpack.c.b16 %v185, %v184
  %v231 = vpack.c.b16 %v187, %v186
  %v232 = vpack.c.b16 %v189, %v188
  %v233 = vpack.c.b16 %v191, %v190
  %v234 = vpack.c.b16 %v193, %v192
  %v235 = vpack.c.b16 %v195, %v194
  %v236 = vpack.c.b16 %v197, %v196
  %v237 = vpack.c.b16 %v199, %v198
  %v238 = vpack.c.b16 %v201, %v200
  %v239 = vpack.c.b16 %v203, %v202
  %v240 = vpack.c.b16 %v205, %v204
  %v241 = vpack.c.b16 %v207, %v206
  %v242 = vpack.c.b16 %v209, %v208
  %v243 = vpack.c.b16 %v211, %v210
  %vm244 = vcmask 64512
  %v246 = vsel %vm244, %v212, 0
  %v249 = vsel %vm244, %v213, 0
  %v252 = vsel %vm244, %v214, 0
  %v255 = vsel %vm244, %v215, 0
  %v258 = vsel %vm244, %v216, 0
  %v261 = vsel %vm244, %v217, 0
  %v264 = vsel %vm244, %v218, 0
  %v267 = vsel %vm244, %v219, 0
  %v270 = vsel %vm244, %v220, 0
  %v273 = vsel %vm244, %v221, 0
  %v276 = vsel %vm244, %v222, 0
  %v279 = vsel %vm244, %v223, 0
  %v282 = vsel %vm244, %v224, 0
  %v285 = vsel %vm244, %v225, 0
  %v288 = vsel %vm244, %v226, 0
  %v291 = vsel %vm244, %v227, 0
  %v294 = vsel %vm244, %v228, 0
  %v297 = vsel %vm244, %v229, 0
  %v300 = vsel %vm244, %v230, 0
  %v303 = vsel %vm244, %v231, 0
  %v306 = vsel %vm244, %v232, 0
  %v309 = vsel %vm244, %v233, 0
  %v312 = vsel %vm244, %v234, 0
  %v315 = vsel %vm244, %v235, 0
  %v318 = vsel %vm244, %v236, 0
  %v321 = vsel %vm244, %v237, 0
  %v324 = vsel %vm244, %v238, 0
  %v327 = vsel %vm244, %v239, 0
  %v330 = vsel %vm244, %v240, 0
  %v333 = vsel %vm244, %v241, 0
  %v336 = vsel %vm244, %v242, 0
  %v339 = vsel %vm244, %v243, 0
  %vm341 = vcmask 1043456
  %v343 = vsel %vm341, %v79, 0
  %345 = vmatpush.bf16.msra.mxu0 0
  %346 = vmatpush.bf16.msra.mxu0 0
  %347 = vmatpush.bf16.msra.mxu0 0
  %348 = vmatpush.bf16.msra.mxu0 0
  %349 = vmatpush.bf16.msra.mxu0 0
  %350 = vmatpush.bf16.msra.mxu0 0
  %351 = vmatpush.bf16.msra.mxu0 0
  %352 = vmatpush.bf16.msra.mxu0 %v343
  %353 = vmatmul.bf16.gmra.mxu0 %v246
  %v354 = vpop.f32.mrf.mxu0
  %v355 = vadd.f32 %v82, %v354
  %v356 = vpop.f32.mrf.mxu0
  %v357 = vadd.f32 %v82, %v356
  %358 = vmatmul.bf16.gmra.mxu0 %v249
  %v359 = vpop.f32.mrf.mxu0
  %v360 = vadd.f32 %v82, %v359
  %v361 = vpop.f32.mrf.mxu0
  %v362 = vadd.f32 %v82, %v361
  %363 = vmatmul.bf16.gmra.mxu0 %v252
  %v364 = vpop.f32.mrf.mxu0
  %v365 = vadd.f32 %v82, %v364
  %v366 = vpop.f32.mrf.mxu0
  %v367 = vadd.f32 %v82, %v366
  %368 = vmatmul.bf16.gmra.mxu0 %v255
  %v369 = vpop.f32.mrf.mxu0
  %v370 = vadd.f32 %v82, %v369
  %v371 = vpop.f32.mrf.mxu0
  %v372 = vadd.f32 %v82, %v371
  %373 = vmatmul.bf16.gmra.mxu0 %v258
  %v374 = vpop.f32.mrf.mxu0
  %v375 = vadd.f32 %v82, %v374
  %v376 = vpop.f32.mrf.mxu0
  %v377 = vadd.f32 %v82, %v376
  %378 = vmatmul.bf16.gmra.mxu0 %v261
  %v379 = vpop.f32.mrf.mxu0
  %v380 = vadd.f32 %v82, %v379
  %v381 = vpop.f32.mrf.mxu0
  %v382 = vadd.f32 %v82, %v381
  %383 = vmatmul.bf16.gmra.mxu0 %v264
  %v384 = vpop.f32.mrf.mxu0
  %v385 = vadd.f32 %v82, %v384
  %v386 = vpop.f32.mrf.mxu0
  %v387 = vadd.f32 %v82, %v386
  %388 = vmatmul.bf16.gmra.mxu0 %v267
  %v389 = vpop.f32.mrf.mxu0
  %v390 = vadd.f32 %v82, %v389
  %v391 = vpop.f32.mrf.mxu0
  %v392 = vadd.f32 %v82, %v391
  %393 = vmatmul.bf16.gmra.mxu0 %v270
  %v394 = vpop.f32.mrf.mxu0
  %v395 = vadd.f32 %v82, %v394
  %v396 = vpop.f32.mrf.mxu0
  %v397 = vadd.f32 %v82, %v396
  %398 = vmatmul.bf16.gmra.mxu0 %v273
  %v399 = vpop.f32.mrf.mxu0
  %v400 = vadd.f32 %v82, %v399
  %v401 = vpop.f32.mrf.mxu0
  %v402 = vadd.f32 %v82, %v401
  %403 = vmatmul.bf16.gmra.mxu0 %v276
  %v404 = vpop.f32.mrf.mxu0
  %v405 = vadd.f32 %v82, %v404
  %v406 = vpop.f32.mrf.mxu0
  %v407 = vadd.f32 %v82, %v406
  %408 = vmatmul.bf16.gmra.mxu0 %v279
  %v409 = vpop.f32.mrf.mxu0
  %v410 = vadd.f32 %v82, %v409
  %v411 = vpop.f32.mrf.mxu0
  %v412 = vadd.f32 %v82, %v411
  %413 = vmatmul.bf16.gmra.mxu0 %v282
  %v414 = vpop.f32.mrf.mxu0
  %v415 = vadd.f32 %v82, %v414
  %v416 = vpop.f32.mrf.mxu0
  %v417 = vadd.f32 %v82, %v416
  %418 = vmatmul.bf16.gmra.mxu0 %v285
  %v419 = vpop.f32.mrf.mxu0
  %v420 = vadd.f32 %v82, %v419
  %v421 = vpop.f32.mrf.mxu0
  %v422 = vadd.f32 %v82, %v421
  %423 = vmatmul.bf16.gmra.mxu0 %v288
  %v424 = vpop.f32.mrf.mxu0
  %v425 = vadd.f32 %v82, %v424
  %v426 = vpop.f32.mrf.mxu0
  %v427 = vadd.f32 %v82, %v426
  %428 = vmatmul.bf16.gmra.mxu0 %v291
  %v429 = vpop.f32.mrf.mxu0
  %v430 = vadd.f32 %v82, %v429
  %v431 = vpop.f32.mrf.mxu0
  %v432 = vadd.f32 %v82, %v431
  %433 = vmatmul.bf16.gmra.mxu0 %v294
  %v434 = vpop.f32.mrf.mxu0
  %v435 = vadd.f32 %v82, %v434
  %v436 = vpop.f32.mrf.mxu0
  %v437 = vadd.f32 %v82, %v436
  %438 = vmatmul.bf16.gmra.mxu0 %v297
  %v439 = vpop.f32.mrf.mxu0
  %v440 = vadd.f32 %v82, %v439
  %v441 = vpop.f32.mrf.mxu0
  %v442 = vadd.f32 %v82, %v441
  %443 = vmatmul.bf16.gmra.mxu0 %v300
  %v444 = vpop.f32.mrf.mxu0
  %v445 = vadd.f32 %v82, %v444
  %v446 = vpop.f32.mrf.mxu0
  %v447 = vadd.f32 %v82, %v446
  %448 = vmatmul.bf16.gmra.mxu0 %v303
  %v449 = vpop.f32.mrf.mxu0
  %v450 = vadd.f32 %v82, %v449
  %v451 = vpop.f32.mrf.mxu0
  %v452 = vadd.f32 %v82, %v451
  %453 = vmatmul.bf16.gmra.mxu0 %v306
  %v454 = vpop.f32.mrf.mxu0
  %v455 = vadd.f32 %v82, %v454
  %v456 = vpop.f32.mrf.mxu0
  %v457 = vadd.f32 %v82, %v456
  %458 = vmatmul.bf16.gmra.mxu0 %v309
  %v459 = vpop.f32.mrf.mxu0
  %v460 = vadd.f32 %v82, %v459
  %v461 = vpop.f32.mrf.mxu0
  %v462 = vadd.f32 %v82, %v461
  %463 = vmatmul.bf16.gmra.mxu0 %v312
  %v464 = vpop.f32.mrf.mxu0
  %v465 = vadd.f32 %v82, %v464
  %v466 = vpop.f32.mrf.mxu0
  %v467 = vadd.f32 %v82, %v466
  %468 = vmatmul.bf16.gmra.mxu0 %v315
  %v469 = vpop.f32.mrf.mxu0
  %v470 = vadd.f32 %v82, %v469
  %v471 = vpop.f32.mrf.mxu0
  %v472 = vadd.f32 %v82, %v471
  %473 = vmatmul.bf16.gmra.mxu0 %v318
  %v474 = vpop.f32.mrf.mxu0
  %v475 = vadd.f32 %v82, %v474
  %v476 = vpop.f32.mrf.mxu0
  %v477 = vadd.f32 %v82, %v476
  %478 = vmatmul.bf16.gmra.mxu0 %v321
  %v479 = vpop.f32.mrf.mxu0
  %v480 = vadd.f32 %v82, %v479
  %v481 = vpop.f32.mrf.mxu0
  %v482 = vadd.f32 %v82, %v481
  %483 = vmatmul.bf16.gmra.mxu0 %v324
  %v484 = vpop.f32.mrf.mxu0
  %v485 = vadd.f32 %v82, %v484
  %v486 = vpop.f32.mrf.mxu0
  %v487 = vadd.f32 %v82, %v486
  %488 = vmatmul.bf16.gmra.mxu0 %v327
  %v489 = vpop.f32.mrf.mxu0
  %v490 = vadd.f32 %v82, %v489
  %v491 = vpop.f32.mrf.mxu0
  %v492 = vadd.f32 %v82, %v491
  %493 = vmatmul.bf16.gmra.mxu0 %v330
  %v494 = vpop.f32.mrf.mxu0
  %v495 = vadd.f32 %v82, %v494
  %v496 = vpop.f32.mrf.mxu0
  %v497 = vadd.f32 %v82, %v496
  %498 = vmatmul.bf16.gmra.mxu0 %v333
  %v499 = vpop.f32.mrf.mxu0
  %v500 = vadd.f32 %v82, %v499
  %v501 = vpop.f32.mrf.mxu0
  %v502 = vadd.f32 %v82, %v501
  %503 = vmatmul.bf16.gmra.mxu0 %v336
  %v504 = vpop.f32.mrf.mxu0
  %v505 = vadd.f32 %v82, %v504
  %v506 = vpop.f32.mrf.mxu0
  %v507 = vadd.f32 %v82, %v506
  %508 = vmatmul.bf16.gmra.mxu0 %v339
  %v509 = vpop.f32.mrf.mxu0
  %v510 = vadd.f32 %v82, %v509
  %v511 = vpop.f32.mrf.mxu0
  %v512 = vadd.f32 %v82, %v511
  %513 = vdwg.mxu0
  %v514 = vmax.f32 %v355, 0.0
  %v515 = vmax.f32 %v357, 0.0
  %v516 = vmax.f32 %v360, 0.0
  %v517 = vmax.f32 %v362, 0.0
  %v518 = vmax.f32 %v365, 0.0
  %v519 = vmax.f32 %v367, 0.0
  %v520 = vmax.f32 %v370, 0.0
  %v521 = vmax.f32 %v372, 0.0
  %v522 = vmax.f32 %v375, 0.0
  %v523 = vmax.f32 %v377, 0.0
  %v524 = vmax.f32 %v380, 0.0
  %v525 = vmax.f32 %v382, 0.0
  %v526 = vmax.f32 %v385, 0.0
  %v527 = vmax.f32 %v387, 0.0
  %v528 = vmax.f32 %v390, 0.0
  %v529 = vmax.f32 %v392, 0.0
  %v530 = vmax.f32 %v395, 0.0
  %v531 = vmax.f32 %v397, 0.0
  %v532 = vmax.f32 %v400, 0.0
  %v533 = vmax.f32 %v402, 0.0
  %v534 = vmax.f32 %v405, 0.0
  %v535 = vmax.f32 %v407, 0.0
  %v536 = vmax.f32 %v410, 0.0
  %v537 = vmax.f32 %v412, 0.0
  %v538 = vmax.f32 %v415, 0.0
  %v539 = vmax.f32 %v417, 0.0
  %v540 = vmax.f32 %v420, 0.0
  %v541 = vmax.f32 %v422, 0.0
  %v542 = vmax.f32 %v425, 0.0
  %v543 = vmax.f32 %v427, 0.0
  %v544 = vmax.f32 %v430, 0.0
  %v545 = vmax.f32 %v432, 0.0
  %v546 = vmax.f32 %v435, 0.0
  %v547 = vmax.f32 %v437, 0.0
  %v548 = vmax.f32 %v440, 0.0
  %v549 = vmax.f32 %v442, 0.0
  %v550 = vmax.f32 %v445, 0.0
  %v551 = vmax.f32 %v447, 0.0
  %v552 = vmax.f32 %v450, 0.0
  %v553 = vmax.f32 %v452, 0.0
  %v554 = vmax.f32 %v455, 0.0
  %v555 = vmax.f32 %v457, 0.0
  %v556 = vmax.f32 %v460, 0.0
  %v557 = vmax.f32 %v462, 0.0
  %v558 = vmax.f32 %v465, 0.0
  %v559 = vmax.f32 %v467, 0.0
  %v560 = vmax.f32 %v470, 0.0
  %v561 = vmax.f32 %v472, 0.0
  %v562 = vmax.f32 %v475, 0.0
  %v563 = vmax.f32 %v477, 0.0
  %v564 = vmax.f32 %v480, 0.0
  %v565 = vmax.f32 %v482, 0.0
  %v566 = vmax.f32 %v485, 0.0
  %v567 = vmax.f32 %v487, 0.0
  %v568 = vmax.f32 %v490, 0.0
  %v569 = vmax.f32 %v492, 0.0
  %v570 = vmax.f32 %v495, 0.0
  %v571 = vmax.f32 %v497, 0.0
  %v572 = vmax.f32 %v500, 0.0
  %v573 = vmax.f32 %v502, 0.0
  %v574 = vmax.f32 %v505, 0.0
  %v575 = vmax.f32 %v507, 0.0
  %v576 = vmax.f32 %v510, 0.0
  %v577 = vmax.f32 %v512, 0.0
  %v578 = vpack.c.bf16 %v514, %v514
  %v579 = vpack.c.bf16 %v515, %v515
  %v580 = vpack.c.bf16 %v516, %v516
  %v581 = vpack.c.bf16 %v517, %v517
  %v582 = vpack.c.bf16 %v518, %v518
  %v583 = vpack.c.bf16 %v519, %v519
  %v584 = vpack.c.bf16 %v520, %v520
  %v585 = vpack.c.bf16 %v521, %v521
  %v586 = vpack.c.bf16 %v522, %v522
  %v587 = vpack.c.bf16 %v523, %v523
  %v588 = vpack.c.bf16 %v524, %v524
  %v589 = vpack.c.bf16 %v525, %v525
  %v590 = vpack.c.bf16 %v526, %v526
  %v591 = vpack.c.bf16 %v527, %v527
  %v592 = vpack.c.bf16 %v528, %v528
  %v593 = vpack.c.bf16 %v529, %v529
  %v594 = vpack.c.bf16 %v530, %v530
  %v595 = vpack.c.bf16 %v531, %v531
  %v596 = vpack.c.bf16 %v532, %v532
  %v597 = vpack.c.bf16 %v533, %v533
  %v598 = vpack.c.bf16 %v534, %v534
  %v599 = vpack.c.bf16 %v535, %v535
  %v600 = vpack.c.bf16 %v536, %v536
  %v601 = vpack.c.bf16 %v537, %v537
  %v602 = vpack.c.bf16 %v538, %v538
  %v603 = vpack.c.bf16 %v539, %v539
  %v604 = vpack.c.bf16 %v540, %v540
  %v605 = vpack.c.bf16 %v541, %v541
  %v606 = vpack.c.bf16 %v542, %v542
  %v607 = vpack.c.bf16 %v543, %v543
  %v608 = vpack.c.bf16 %v544, %v544
  %v609 = vpack.c.bf16 %v545, %v545
  %v610 = vpack.c.bf16 %v546, %v546
  %v611 = vpack.c.bf16 %v547, %v547
  %v612 = vpack.c.bf16 %v548, %v548
  %v613 = vpack.c.bf16 %v549, %v549
  %v614 = vpack.c.bf16 %v550, %v550
  %v615 = vpack.c.bf16 %v551, %v551
  %v616 = vpack.c.bf16 %v552, %v552
  %v617 = vpack.c.bf16 %v553, %v553
  %v618 = vpack.c.bf16 %v554, %v554
  %v619 = vpack.c.bf16 %v555, %v555
  %v620 = vpack.c.bf16 %v556, %v556
  %v621 = vpack.c.bf16 %v557, %v557
  %v622 = vpack.c.bf16 %v558, %v558
  %v623 = vpack.c.bf16 %v559, %v559
  %v624 = vpack.c.bf16 %v560, %v560
  %v625 = vpack.c.bf16 %v561, %v561
  %v626 = vpack.c.bf16 %v562, %v562
  %v627 = vpack.c.bf16 %v563, %v563
  %v628 = vpack.c.bf16 %v564, %v564
  %v629 = vpack.c.bf16 %v565, %v565
  %v630 = vpack.c.bf16 %v566, %v566
  %v631 = vpack.c.bf16 %v567, %v567
  %v632 = vpack.c.bf16 %v568, %v568
  %v633 = vpack.c.bf16 %v569, %v569
  %v634 = vpack.c.bf16 %v570, %v570
  %v635 = vpack.c.bf16 %v571, %v571
  %v636 = vpack.c.bf16 %v572, %v572
  %v637 = vpack.c.bf16 %v573, %v573
  %v638 = vpack.c.bf16 %v574, %v574
  %v639 = vpack.c.bf16 %v575, %v575
  %v640 = vpack.c.bf16 %v576, %v576
  %v641 = vpack.c.bf16 %v577, %v577
  %vm642 = vcmask 27648
  %643 = vst.msk [vmem:[%s3] sm:$0xf] %vm642, %v578
  %644 = vst.msk [vmem:[%s3 + $0x4] sm:$0xf] %vm642, %v579
  %645 = vst.msk [vmem:[%s3 + $0x8] sm:$0xf] %vm642, %v580
  %646 = vst.msk [vmem:[%s3 + $0xc] sm:$0xf] %vm642, %v581
  %647 = vst.msk [vmem:[%s3 + $0x10] sm:$0xf] %vm642, %v582
  %648 = vst.msk [vmem:[%s3 + $0x14] sm:$0xf] %vm642, %v583
  %649 = vst.msk [vmem:[%s3 + $0x18] sm:$0xf] %vm642, %v584
  %650 = vst.msk [vmem:[%s3 + $0x1c] sm:$0xf] %vm642, %v585
  %651 = vst.msk [vmem:[%s3 + $0x20] sm:$0xf] %vm642, %v586
  %652 = vst.msk [vmem:[%s3 + $0x24] sm:$0xf] %vm642, %v587
  %653 = vst.msk [vmem:[%s3 + $0x28] sm:$0xf] %vm642, %v588
  %654 = vst.msk [vmem:[%s3 + $0x2c] sm:$0xf] %vm642, %v589
  %655 = vst.msk [vmem:[%s3 + $0x30] sm:$0xf] %vm642, %v590
  %656 = vst.msk [vmem:[%s3 + $0x34] sm:$0xf] %vm642, %v591
  %657 = vst.msk [vmem:[%s3 + $0x38] sm:$0xf] %vm642, %v592
  %658 = vst.msk [vmem:[%s3 + $0x3c] sm:$0xf] %vm642, %v593
  %659 = vst.msk [vmem:[%s3 + $0x40] sm:$0xf] %vm642, %v594
  %660 = vst.msk [vmem:[%s3 + $0x44] sm:$0xf] %vm642, %v595
  %661 = vst.msk [vmem:[%s3 + $0x48] sm:$0xf] %vm642, %v596
  %662 = vst.msk [vmem:[%s3 + $0x4c] sm:$0xf] %vm642, %v597
  %663 = vst.msk [vmem:[%s3 + $0x50] sm:$0xf] %vm642, %v598
  %664 = vst.msk [vmem:[%s3 + $0x54] sm:$0xf] %vm642, %v599
  %665 = vst.msk [vmem:[%s3 + $0x58] sm:$0xf] %vm642, %v600
  %666 = vst.msk [vmem:[%s3 + $0x5c] sm:$0xf] %vm642, %v601
  %667 = vst.msk [vmem:[%s3 + $0x60] sm:$0xf] %vm642, %v602
  %668 = vst.msk [vmem:[%s3 + $0x64] sm:$0xf] %vm642, %v603
  %669 = vst.msk [vmem:[%s3 + $0x68] sm:$0xf] %vm642, %v604
  %670 = vst.msk [vmem:[%s3 + $0x6c] sm:$0xf] %vm642, %v605
  %671 = vst.msk [vmem:[%s3 + $0x70] sm:$0xf] %vm642, %v606
  %672 = vst.msk [vmem:[%s3 + $0x74] sm:$0xf] %vm642, %v607
  %673 = vst.msk [vmem:[%s3 + $0x78] sm:$0xf] %vm642, %v608
  %674 = vst.msk [vmem:[%s3 + $0x7c] sm:$0xf] %vm642, %v609
  %675 = vst.msk [vmem:[%s3 + $0x80] sm:$0xf] %vm642, %v610
  %676 = vst.msk [vmem:[%s3 + $0x84] sm:$0xf] %vm642, %v611
  %677 = vst.msk [vmem:[%s3 + $0x88] sm:$0xf] %vm642, %v612
  %678 = vst.msk [vmem:[%s3 + $0x8c] sm:$0xf] %vm642, %v613
  %679 = vst.msk [vmem:[%s3 + $0x90] sm:$0xf] %vm642, %v614
  %680 = vst.msk [vmem:[%s3 + $0x94] sm:$0xf] %vm642, %v615
  %681 = vst.msk [vmem:[%s3 + $0x98] sm:$0xf] %vm642, %v616
  %682 = vst.msk [vmem:[%s3 + $0x9c] sm:$0xf] %vm642, %v617
  %683 = vst.msk [vmem:[%s3 + $0xa0] sm:$0xf] %vm642, %v618
  %684 = vst.msk [vmem:[%s3 + $0xa4] sm:$0xf] %vm642, %v619
  %685 = vst.msk [vmem:[%s3 + $0xa8] sm:$0xf] %vm642, %v620
  %686 = vst.msk [vmem:[%s3 + $0xac] sm:$0xf] %vm642, %v621
  %687 = vst.msk [vmem:[%s3 + $0xb0] sm:$0xf] %vm642, %v622
  %688 = vst.msk [vmem:[%s3 + $0xb4] sm:$0xf] %vm642, %v623
  %689 = vst.msk [vmem:[%s3 + $0xb8] sm:$0xf] %vm642, %v624
  %690 = vst.msk [vmem:[%s3 + $0xbc] sm:$0xf] %vm642, %v625
  %691 = vst.msk [vmem:[%s3 + $0xc0] sm:$0xf] %vm642, %v626
  %692 = vst.msk [vmem:[%s3 + $0xc4] sm:$0xf] %vm642, %v627
  %693 = vst.msk [vmem:[%s3 + $0xc8] sm:$0xf] %vm642, %v628
  %694 = vst.msk [vmem:[%s3 + $0xcc] sm:$0xf] %vm642, %v629
  %695 = vst.msk [vmem:[%s3 + $0xd0] sm:$0xf] %vm642, %v630
  %696 = vst.msk [vmem:[%s3 + $0xd4] sm:$0xf] %vm642, %v631
  %697 = vst.msk [vmem:[%s3 + $0xd8] sm:$0xf] %vm642, %v632
  %698 = vst.msk [vmem:[%s3 + $0xdc] sm:$0xf] %vm642, %v633
  %699 = vst.msk [vmem:[%s3 + $0xe0] sm:$0xf] %vm642, %v634
  %700 = vst.msk [vmem:[%s3 + $0xe4] sm:$0xf] %vm642, %v635
  %701 = vst.msk [vmem:[%s3 + $0xe8] sm:$0xf] %vm642, %v636
  %702 = vst.msk [vmem:[%s3 + $0xec] sm:$0xf] %vm642, %v637
  %703 = vst.msk [vmem:[%s3 + $0xf0] sm:$0xf] %vm642, %v638
  %704 = vst.msk [vmem:[%s3 + $0xf4] sm:$0xf] %vm642, %v639
  %705 = vst.msk [vmem:[%s3 + $0xf8] sm:$0xf] %vm642, %v640
  %706 = vst.msk [vmem:[%s3 + $0xfc] sm:$0xf] %vm642, %v641
  // Predicated region
  $region14: #{bottleneck_forward.3} parent=0 // pred_check
    _
  $region15: #{bottleneck_forward.3} parent=0 // pred_check_branch
    %708 = sbr.rel (0) target = $region17
  $region16: #{bottleneck_forward.3} parent=0 // pred_region
    _
  $region17: #{bottleneck_forward.3} parent=0 // pred_fallthru
    _
  // Predicated region
  $region18: #{bottleneck_forward.3} parent=0 // pred_check
    _
  $region19: #{bottleneck_forward.3} parent=0 // pred_check_branch
    %710 = sbr.rel (0) target = $region21
  $region20: #{bottleneck_forward.3} parent=0 // pred_region
    _
  $region21: #{bottleneck_forward.3} parent=0 // pred_fallthru
    _

// kernel: bottleneck_forward.5
$region0: #{bottleneck_forward.5}
  #allocation0 [shape = 'u32[]', space=smem, size = 0x4, offset = 0x4, fixed_abs, tag = 'smem constant byte address 0x4 - core index']
  #allocation1 [shape = 'u32[72,128]{1,0:T(1,128)}', space=vmem, size = 0x9000, scoped, tag = 'internal scratch']
  %s0 = inlined_call_operand.vmem [shape: bf16[128,4], index: 0, kind: input, shape index: {}]
  %s1 = inlined_call_operand.vmem [shape: bf16[4,16], index: 1, kind: input, shape index: {}]
  %s2 = inlined_call_operand.vmem [shape: f32[1,16], index: 2, kind: input, shape index: {}]
  %s3 = inlined_call_operand.vmem [shape: bf16[128,8], index: 3, kind: input, shape index: {}]
  %s4 = inlined_call_operand.vmem [shape: bf16[8,16], index: 4, kind: input, shape index: {}]
  %s5 = inlined_call_operand.vmem [shape: f32[1,16], index: 5, kind: input, shape index: {}]
  %s6 = inlined_call_operand.hbm [shape: bf16[128,16], index: 6, kind: output, shape index: {}]
  %s7 = sld [smem:[#allocation0]]
  $region34: #{bottleneck_forward.5} parent=0
    _
  %s9 = ssub.s32 1, %s7
  %s10 = scalar_select 0, %s9, %s7
  $region1: #{bottleneck_forward.5} parent=0
    #allocation2 [shape = 'u8[32768]{0}', space=vmem, size = 0x8000, scoped, tag = 'output window, operand 0, single buffered']
    #allocation3 [shape = 's32[1]{0}', space=sflag, size = 0x4, scoped, tag = 'scoped memory for bottleneck_forward.5']
    %11 = vsyncpa [#allocation3], 0
    // Predicated region
    $region2: #{bottleneck_forward.5} parent=1 // pred_check
      _
    $region3: #{bottleneck_forward.5} parent=1 // pred_check_branch
      %13 = sbr.rel (0) target = $region5
    $region4: #{bottleneck_forward.5} parent=1 // pred_region
      _
    $region5: #{bottleneck_forward.5} parent=1 // pred_fallthru
      _
    // Predicated region
    $region6: #{bottleneck_forward.5} parent=1 // pred_check
      _
    $region7: #{bottleneck_forward.5} parent=1 // pred_check_branch
      %15 = sbr.rel (0) target = $region9
    $region8: #{bottleneck_forward.5} parent=1 // pred_region
      _
    $region9: #{bottleneck_forward.5} parent=1 // pred_fallthru
      _
    // Predicated region
    $region10: #{bottleneck_forward.5} parent=1 // pred_check
      _
    $region11: #{bottleneck_forward.5} parent=1 // pred_check_branch
      %17 = sbr.rel (0) target = $region13
    $region12: #{bottleneck_forward.5} parent=1 // pred_region
      _
    $region13: #{bottleneck_forward.5} parent=1 // pred_fallthru
      _
    // Predicated region
    $region14: #{bottleneck_forward.5} parent=1 // pred_check
      _
    $region15: #{bottleneck_forward.5} parent=1 // pred_check_branch
      %19 = sbr.rel (0) target = $region17
    $region16: #{bottleneck_forward.5} parent=1 // pred_region
      _
    $region17: #{bottleneck_forward.5} parent=1 // pred_fallthru
      _
    // Predicated region
    $region18: #{bottleneck_forward.5} parent=1 // pred_check
      _
    $region19: #{bottleneck_forward.5} parent=1 // pred_check_branch
      %21 = sbr.rel (0) target = $region21
    $region20: #{bottleneck_forward.5} parent=1 // pred_region
      _
    $region21: #{bottleneck_forward.5} parent=1 // pred_fallthru
      _
    // Predicated region
    $region22: #{bottleneck_forward.5} parent=1 // pred_check
      _
    $region23: #{bottleneck_forward.5} parent=1 // pred_check_branch
      %23 = sbr.rel (0) target = $region25
    $region24: #{bottleneck_forward.5} parent=1 // pred_region
      _
    $region25: #{bottleneck_forward.5} parent=1 // pred_fallthru
      _
    %v25 = vld [vmem:[%s0] sm:$0xf]
    %v26 = vld [vmem:[%s0 + $0x4] sm:$0xf]
    %v27 = vld [vmem:[%s0 + $0x8] sm:$0xf]
    %v28 = vld [vmem:[%s0 + $0xc] sm:$0xf]
    %v29 = vld [vmem:[%s0 + $0x10] sm:$0xf]
    %v30 = vld [vmem:[%s0 + $0x14] sm:$0xf]
    %v31 = vld [vmem:[%s0 + $0x18] sm:$0xf]
    %v32 = vld [vmem:[%s0 + $0x1c] sm:$0xf]
    %v33 = vld [vmem:[%s0 + $0x20] sm:$0xf]
    %v34 = vld [vmem:[%s0 + $0x24] sm:$0xf]
    %v35 = vld [vmem:[%s0 + $0x28] sm:$0xf]
    %v36 = vld [vmem:[%s0 + $0x2c] sm:$0xf]
    %v37 = vld [vmem:[%s0 + $0x30] sm:$0xf]
    %v38 = vld [vmem:[%s0 + $0x34] sm:$0xf]
    %v39 = vld [vmem:[%s0 + $0x38] sm:$0xf]
    %v40 = vld [vmem:[%s0 + $0x3c] sm:$0xf]
    %v41 = vld [vmem:[%s1] sm:$0x3]
    %v42 = vld [vmem:[%s2] sm:$0x1]
    %v44 = vperm.slane %v42, 0
    %v62 = vunpack.c.l.b16 %v25
    %v63 = vunpack.c.l.b16 %v26
    %v64 = vunpack.c.l.b16 %v27
    %v65 = vunpack.c.l.b16 %v28
    %v66 = vunpack.c.l.b16 %v29
    %v67 = vunpack.c.l.b16 %v30
    %v68 = vunpack.c.l.b16 %v31
    %v69 = vunpack.c.l.b16 %v32
    %v70 = vunpack.c.l.b16 %v33
    %v71 = vunpack.c.l.b16 %v34
    %v72 = vunpack.c.l.b16 %v35
    %v73 = vunpack.c.l.b16 %v36
    %v74 = vunpack.c.l.b16 %v37
    %v75 = vunpack.c.l.b16 %v38
    %v76 = vunpack.c.l.b16 %v39
    %v77 = vunpack.c.l.b16 %v40
    %v78 = vpack.c.b16 %v63, %v62
    %v79 = vpack.c.b16 %v65, %v64
    %v80 = vpack.c.b16 %v67, %v66
    %v81 = vpack.c.b16 %v69, %v68
    %v82 = vpack.c.b16 %v71, %v70
    %v83 = vpack.c.b16 %v73, %v72
    %v84 = vpack.c.b16 %v75, %v74
    %v85 = vpack.c.b16 %v77, %v76
    %vm86 = vcmask 31744
    %v88 = vsel %vm86, %v78, 0
    %v91 = vsel %vm86, %v79, 0
    %v94 = vsel %vm86, %v80, 0
    %v97 = vsel %vm86, %v81, 0
    %v100 = vsel %vm86, %v82, 0
    %v103 = vsel %vm86, %v83, 0
    %v106 = vsel %vm86, %v84, 0
    %v109 = vsel %vm86, %v85, 0
    %vm111 = vcmask 1041408
    %v113 = vsel %vm111, %v41, 0
    %115 = vmatpush.bf16.msra.mxu0 0
    %116 = vmatpush.bf16.msra.mxu0 0
    %117 = vmatpush.bf16.msra.mxu0 0
    %118 = vmatpush.bf16.msra.mxu0 0
    %119 = vmatpush.bf16.msra.mxu0 0
    %120 = vmatpush.bf16.msra.mxu0 0
    %121 = vmatpush.bf16.msra.mxu0 0
    %122 = vmatpush.bf16.msra.mxu0 %v113
    %123 = vmatmul.bf16.gmra.mxu0 %v88
    %v124 = vpop.f32.mrf.mxu0
    %v125 = vadd.f32 %v44, %v124
    %v126 = vpop.f32.mrf.mxu0
    %v127 = vadd.f32 %v44, %v126
    %128 = vmatmul.bf16.gmra.mxu0 %v91
    %v129 = vpop.f32.mrf.mxu0
    %v130 = vadd.f32 %v44, %v129
    %v131 = vpop.f32.mrf.mxu0
    %v132 = vadd.f32 %v44, %v131
    %133 = vmatmul.bf16.gmra.mxu0 %v94
    %v134 = vpop.f32.mrf.mxu0
    %v135 = vadd.f32 %v44, %v134
    %v136 = vpop.f32.mrf.mxu0
    %v137 = vadd.f32 %v44, %v136
    %138 = vmatmul.bf16.gmra.mxu0 %v97
    %v139 = vpop.f32.mrf.mxu0
    %v140 = vadd.f32 %v44, %v139
    %v141 = vpop.f32.mrf.mxu0
    %v142 = vadd.f32 %v44, %v141
    %143 = vmatmul.bf16.gmra.mxu0 %v100
    %v144 = vpop.f32.mrf.mxu0
    %v145 = vadd.f32 %v44, %v144
    %v146 = vpop.f32.mrf.mxu0
    %v147 = vadd.f32 %v44, %v146
    %148 = vmatmul.bf16.gmra.mxu0 %v103
    %v149 = vpop.f32.mrf.mxu0
    %v150 = vadd.f32 %v44, %v149
    %v151 = vpop.f32.mrf.mxu0
    %v152 = vadd.f32 %v44, %v151
    %153 = vmatmul.bf16.gmra.mxu0 %v106
    %v154 = vpop.f32.mrf.mxu0
    %v155 = vadd.f32 %v44, %v154
    %v156 = vpop.f32.mrf.mxu0
    %v157 = vadd.f32 %v44, %v156
    %158 = vmatmul.bf16.gmra.mxu0 %v109
    %v159 = vpop.f32.mrf.mxu0
    %v160 = vadd.f32 %v44, %v159
    %v161 = vpop.f32.mrf.mxu0
    %v162 = vadd.f32 %v44, %v161
    %163 = vdwg.mxu0
    %v164 = vld [vmem:[%s3] sm:$0xf]
    %v165 = vld [vmem:[%s3 + $0x4] sm:$0xf]
    %v166 = vld [vmem:[%s3 + $0x8] sm:$0xf]
    %v167 = vld [vmem:[%s3 + $0xc] sm:$0xf]
    %v168 = vld [vmem:[%s3 + $0x10] sm:$0xf]
    %v169 = vld [vmem:[%s3 + $0x14] sm:$0xf]
    %v170 = vld [vmem:[%s3 + $0x18] sm:$0xf]
    %v171 = vld [vmem:[%s3 + $0x1c] sm:$0xf]
    %v172 = vld [vmem:[%s3 + $0x20] sm:$0xf]
    %v173 = vld [vmem:[%s3 + $0x24] sm:$0xf]
    %v174 = vld [vmem:[%s3 + $0x28] sm:$0xf]
    %v175 = vld [vmem:[%s3 + $0x2c] sm:$0xf]
    %v176 = vld [vmem:[%s3 + $0x30] sm:$0xf]
    %v177 = vld [vmem:[%s3 + $0x34] sm:$0xf]
    %v178 = vld [vmem:[%s3 + $0x38] sm:$0xf]
    %v179 = vld [vmem:[%s3 + $0x3c] sm:$0xf]
    %v180 = vld [vmem:[%s4] sm:$0xf]
    %v197 = vunpack.c.l.b16 %v164
    %v198 = vunpack.c.l.b16 %v165
    %v199 = vunpack.c.l.b16 %v166
    %v200 = vunpack.c.l.b16 %v167
    %v201 = vunpack.c.l.b16 %v168
    %v202 = vunpack.c.l.b16 %v169
    %v203 = vunpack.c.l.b16 %v170
    %v204 = vunpack.c.l.b16 %v171
    %v205 = vunpack.c.l.b16 %v172
    %v206 = vunpack.c.l.b16 %v173
    %v207 = vunpack.c.l.b16 %v174
    %v208 = vunpack.c.l.b16 %v175
    %v209 = vunpack.c.l.b16 %v176
    %v210 = vunpack.c.l.b16 %v177
    %v211 = vunpack.c.l.b16 %v178
    %v212 = vunpack.c.l.b16 %v179
    %v213 = vpack.c.b16 %v198, %v197
    %v214 = vpack.c.b16 %v200, %v199
    %v215 = vpack.c.b16 %v202, %v201
    %v216 = vpack.c.b16 %v204, %v203
    %v217 = vpack.c.b16 %v206, %v205
    %v218 = vpack.c.b16 %v208, %v207
    %v219 = vpack.c.b16 %v210, %v209
    %v220 = vpack.c.b16 %v212, %v211
    %vm221 = vcmask 64512
    %v223 = vsel %vm221, %v213, 0
    %v226 = vsel %vm221, %v214, 0
    %v229 = vsel %vm221, %v215, 0
    %v232 = vsel %vm221, %v216, 0
    %v235 = vsel %vm221, %v217, 0
    %v238 = vsel %vm221, %v218, 0
    %v241 = vsel %vm221, %v219, 0
    %v244 = vsel %vm221, %v220, 0
    %vm246 = vcmask 1043456
    %v248 = vsel %vm246, %v180, 0
    %250 = vmatpush.bf16.msra.mxu0 0
    %251 = vmatpush.bf16.msra.mxu0 0
    %252 = vmatpush.bf16.msra.mxu0 0
    %253 = vmatpush.bf16.msra.mxu0 0
    %254 = vmatpush.bf16.msra.mxu0 0
    %255 = vmatpush.bf16.msra.mxu0 0
    %256 = vmatpush.bf16.msra.mxu0 0
    %257 = vmatpush.bf16.msra.mxu0 %v248
    %258 = vmatmul.bf16.gmra.mxu0 %v223
    %v259 = vpop.f32.mrf.mxu0
    %v260 = vadd.f32 0.0, %v259
    %v261 = vpop.f32.mrf.mxu0
    %v262 = vadd.f32 0.0, %v261
    %263 = vmatmul.bf16.gmra.mxu0 %v226
    %v264 = vpop.f32.mrf.mxu0
    %v265 = vadd.f32 0.0, %v264
    %v266 = vpop.f32.mrf.mxu0
    %v267 = vadd.f32 0.0, %v266
    %268 = vmatmul.bf16.gmra.mxu0 %v229
    %v269 = vpop.f32.mrf.mxu0
    %v270 = vadd.f32 0.0, %v269
    %v271 = vpop.f32.mrf.mxu0
    %v272 = vadd.f32 0.0, %v271
    %273 = vmatmul.bf16.gmra.mxu0 %v232
    %v274 = vpop.f32.mrf.mxu0
    %v275 = vadd.f32 0.0, %v274
    %v276 = vpop.f32.mrf.mxu0
    %v277 = vadd.f32 0.0, %v276
    %278 = vmatmul.bf16.gmra.mxu0 %v235
    %v279 = vpop.f32.mrf.mxu0
    %v280 = vadd.f32 0.0, %v279
    %v281 = vpop.f32.mrf.mxu0
    %v282 = vadd.f32 0.0, %v281
    %283 = vmatmul.bf16.gmra.mxu0 %v238
    %v284 = vpop.f32.mrf.mxu0
    %v285 = vadd.f32 0.0, %v284
    %v286 = vpop.f32.mrf.mxu0
    %v287 = vadd.f32 0.0, %v286
    %288 = vmatmul.bf16.gmra.mxu0 %v241
    %v289 = vpop.f32.mrf.mxu0
    %v290 = vadd.f32 0.0, %v289
    %v291 = vpop.f32.mrf.mxu0
    %v292 = vadd.f32 0.0, %v291
    %293 = vmatmul.bf16.gmra.mxu0 %v244
    %v294 = vpop.f32.mrf.mxu0
    %v295 = vadd.f32 0.0, %v294
    %v296 = vpop.f32.mrf.mxu0
    %v297 = vadd.f32 0.0, %v296
    %298 = vdwg.mxu0
    %v299 = vadd.f32 %v125, %v260
    %v300 = vadd.f32 %v127, %v262
    %v301 = vadd.f32 %v130, %v265
    %v302 = vadd.f32 %v132, %v267
    %v303 = vadd.f32 %v135, %v270
    %v304 = vadd.f32 %v137, %v272
    %v305 = vadd.f32 %v140, %v275
    %v306 = vadd.f32 %v142, %v277
    %v307 = vadd.f32 %v145, %v280
    %v308 = vadd.f32 %v147, %v282
    %v309 = vadd.f32 %v150, %v285
    %v310 = vadd.f32 %v152, %v287
    %v311 = vadd.f32 %v155, %v290
    %v312 = vadd.f32 %v157, %v292
    %v313 = vadd.f32 %v160, %v295
    %v314 = vadd.f32 %v162, %v297
    %v315 = vld [vmem:[%s5] sm:$0x1]
    %v317 = vperm.slane %v315, 0
    %v319 = vadd.f32 %v299, %v317
    %v320 = vadd.f32 %v300, %v317
    %v321 = vadd.f32 %v301, %v317
    %v322 = vadd.f32 %v302, %v317
    %v323 = vadd.f32 %v303, %v317
    %v324 = vadd.f32 %v304, %v317
    %v325 = vadd.f32 %v305, %v317
    %v326 = vadd.f32 %v306, %v317
    %v327 = vadd.f32 %v307, %v317
    %v328 = vadd.f32 %v308, %v317
    %v329 = vadd.f32 %v309, %v317
    %v330 = vadd.f32 %v310, %v317
    %v331 = vadd.f32 %v311, %v317
    %v332 = vadd.f32 %v312, %v317
    %v333 = vadd.f32 %v313, %v317
    %v334 = vadd.f32 %v314, %v317
    %v335 = vmax.f32 %v319, 0.0
    %v336 = vmax.f32 %v320, 0.0
    %v337 = vmax.f32 %v321, 0.0
    %v338 = vmax.f32 %v322, 0.0
    %v339 = vmax.f32 %v323, 0.0
    %v340 = vmax.f32 %v324, 0.0
    %v341 = vmax.f32 %v325, 0.0
    %v342 = vmax.f32 %v326, 0.0
    %v343 = vmax.f32 %v327, 0.0
    %v344 = vmax.f32 %v328, 0.0
    %v345 = vmax.f32 %v329, 0.0
    %v346 = vmax.f32 %v330, 0.0
    %v347 = vmax.f32 %v331, 0.0
    %v348 = vmax.f32 %v332, 0.0
    %v349 = vmax.f32 %v333, 0.0
    %v350 = vmax.f32 %v334, 0.0
    %v351 = vpack.c.bf16 %v335, %v335
    %v352 = vpack.c.bf16 %v336, %v336
    %v353 = vpack.c.bf16 %v337, %v337
    %v354 = vpack.c.bf16 %v338, %v338
    %v355 = vpack.c.bf16 %v339, %v339
    %v356 = vpack.c.bf16 %v340, %v340
    %v357 = vpack.c.bf16 %v341, %v341
    %v358 = vpack.c.bf16 %v342, %v342
    %v359 = vpack.c.bf16 %v343, %v343
    %v360 = vpack.c.bf16 %v344, %v344
    %v361 = vpack.c.bf16 %v345, %v345
    %v362 = vpack.c.bf16 %v346, %v346
    %v363 = vpack.c.bf16 %v347, %v347
    %v364 = vpack.c.bf16 %v348, %v348
    %v365 = vpack.c.bf16 %v349, %v349
    %v366 = vpack.c.bf16 %v350, %v350
    %vm367 = vcmask 125952
    %368 = vst.msk [vmem:[#allocation2] sm:$0xf] %vm367, %v351
    %369 = vst.msk [vmem:[#allocation2 + $0x4] sm:$0xf] %vm367, %v352
    %370 = vst.msk [vmem:[#allocation2 + $0x8] sm:$0xf] %vm367, %v353
    %371 = vst.msk [vmem:[#allocation2 + $0xc] sm:$0xf] %vm367, %v354
    %372 = vst.msk [vmem:[#allocation2 + $0x10] sm:$0xf] %vm367, %v355
    %373 = vst.msk [vmem:[#allocation2 + $0x14] sm:$0xf] %vm367, %v356
    %374 = vst.msk [vmem:[#allocation2 + $0x18] sm:$0xf] %vm367, %v357
    %375 = vst.msk [vmem:[#allocation2 + $0x1c] sm:$0xf] %vm367, %v358
    %376 = vst.msk [vmem:[#allocation2 + $0x20] sm:$0xf] %vm367, %v359
    %377 = vst.msk [vmem:[#allocation2 + $0x24] sm:$0xf] %vm367, %v360
    %378 = vst.msk [vmem:[#allocation2 + $0x28] sm:$0xf] %vm367, %v361
    %379 = vst.msk [vmem:[#allocation2 + $0x2c] sm:$0xf] %vm367, %v362
    %380 = vst.msk [vmem:[#allocation2 + $0x30] sm:$0xf] %vm367, %v363
    %381 = vst.msk [vmem:[#allocation2 + $0x34] sm:$0xf] %vm367, %v364
    %382 = vst.msk [vmem:[#allocation2 + $0x38] sm:$0xf] %vm367, %v365
    %383 = vst.msk [vmem:[#allocation2 + $0x3c] sm:$0xf] %vm367, %v366
    // Predicated region
    $region26: #{bottleneck_forward.5} parent=1 // pred_check
      _
    $region27: #{bottleneck_forward.5} parent=1 // pred_check_branch
      %385 = sbr.rel (0) target = $region29
    $region28: #{bottleneck_forward.5} parent=1 // pred_region
      %387 = vsyncadd [#allocation3], 0
      %s388 = sshll.u32 [#allocation2], 4
      %s389 = int_to_ptr.vmem [resolvable:$true] %s388
      %s390 = sshll.u32 %s6, 4
      %s391 = int_to_ptr.hbm [resolvable:$true] %s390
      %396 = dma.vmem_to_hbm [thread:$0]  %s389, 1024, %s391, [#allocation3], 64, 64, 4
    $region29: #{bottleneck_forward.5} parent=1 // pred_fallthru
      _
    // Predicated region
    $region30: #{bottleneck_forward.5} parent=1 // pred_check
      _
    $region31: #{bottleneck_forward.5} parent=1 // pred_check_branch
      %398 = sbr.rel (0) target = $region33
    $region32: #{bottleneck_forward.5} parent=1 // pred_region
      %400 = dma.done [#allocation3], 1024
    $region33: #{bottleneck_forward.5} parent=1 // pred_fallthru
      _
    %401 = vsyncpa [#allocation3], 1

// kernel: bottleneck_forward.4
$region0: #{bottleneck_forward.4}
  #allocation0 [shape = 'u32[]', space=smem, size = 0x4, offset = 0x4, fixed_abs, tag = 'smem constant byte address 0x4 - core index']
  #allocation1 [shape = 'u32[72,128]{1,0:T(1,128)}', space=vmem, size = 0x9000, scoped, tag = 'internal scratch']
  %s0 = inlined_call_operand.vmem [shape: bf16[8,9,9,4], index: 0, kind: input, shape index: {}]
  %s1 = inlined_call_operand.vmem [shape: bf16[9,4,4], index: 1, kind: input, shape index: {}]
  %s2 = inlined_call_operand.vmem [shape: f32[1,4], index: 2, kind: input, shape index: {}]
  %s3 = inlined_call_operand.vmem [shape: bf16[2,64,4], index: 3, kind: output, shape index: {}]
  %s4 = sld [smem:[#allocation0]]
  $region45: #{bottleneck_forward.4} parent=0
    _
  %s6 = ssub.s32 1, %s4
  %s7 = scalar_select 0, %s6, %s4
  loop: start=0, step=1, limit=4
  $region2: #{bottleneck_forward.4} parent=0 // loop_pre_header
    _
  $region3: #{bottleneck_forward.4} parent=0 // loop_header
    %s9 = sphi 0, %s13
    %p10 = scmp.ge.s32.totalorder %s9, 4
    %s16 = sphi 0, %s28
    %s17 = sphi 0, %s24
    %s18 = sphi 0, %s16
    %s19 = sphi 0, %s17
    %s20 = sphi 0, %s18
    %s21 = sphi 0, %s19
    %s31 = sphi 0, %s33
    %s34 = sphi 0, %s31
    %s35 = sphi 0, %s34
    %s51 = sphi 0, %s35
    %s55 = sphi 0, %s55
    %s57 = sphi 0, %s55
    %s58 = sphi 0, %s57
    %s72 = sphi 0, %s58
    %s76 = sphi 0, %s76
    %s78 = sphi 0, %s76
    %s79 = sphi 0, %s78
    %s93 = sphi 0, %s79
    %s101 = sphi 0, %s103
    %s104 = sphi 0, %s101
    %s105 = sphi 0, %s104
    %s121 = sphi 0, %s105
  $region4: #{bottleneck_forward.4} parent=0 // loop_header_branch
    %12 = sbr.rel (%p10) target = $region8
  $region5: #{bottleneck_forward.4} parent=0 // loop_body
    %s14 = ssub.s32 %s9, 1
    %s15 = ssub.s32 %s9, 2
    %s22 = sadd.s32 1, %s17
    %p23 = scmp.ge.s32.totalorder %s22, 1
    %s24 = scalar_select %p23, 0, %s22
    %s25 = sadd.s32 1, %s16
    %s26 = scalar_select %p23, %s25, %s16
    %p27 = scmp.ge.s32.totalorder %s26, 2
    %s28 = scalar_select %p27, 0, %s26
    %s29 = ssub.s32 %s16, %s28
    %p30 = scmp.eq.s32.totalorder %s29, 0
    %s32 = sadd.s32 %s31, 1
    %s33 = scalar_select %p30, %s31, %s32
    %p36 = pneg %p30
    %p37 = scmp.eq.s32.totalorder %s9, 1
    %p38 = por %p36, %p37
    %p39 = scmp.ne.s32.totalorder %s31, %s34
    %p40 = scmp.eq.s32.totalorder %s9, 0
    %p41 = por %p39, %p40
    %p42 = scmp.ne.s32.totalorder %s31, %s34
    %p43 = scmp.eq.s32.totalorder %s14, 1
    %p44 = por %p42, %p43
    %p45 = scmp.ne.s32.totalorder %s34, %s35
    %p46 = scmp.eq.s32.totalorder %s14, 0
    %p47 = por %p45, %p46
    %p48 = scmp.ne.s32.totalorder %s34, %s35
    %p49 = scmp.eq.s32.totalorder %s15, 1
    %p50 = por %p48, %p49
    %p52 = scmp.ne.s32.totalorder %s35, %s51
    %p53 = scmp.eq.s32.totalorder %s15, 0
    %p54 = por %p52, %p53
    %s56 = sadd.s32 %s55, 1
    %p59 = scmp.eq.s32.totalorder %s9, 1
    %p60 = scmp.ne.s32.totalorder %s55, %s57
    %p61 = scmp.eq.s32.totalorder %s9, 0
    %p62 = por %p60, %p61
    %p63 = scmp.ne.s32.totalorder %s55, %s57
    %p64 = scmp.eq.s32.totalorder %s14, 1
    %p65 = por %p63, %p64
    %p66 = scmp.ne.s32.totalorder %s57, %s58
    %p67 = scmp.eq.s32.totalorder %s14, 0
    %p68 = por %p66, %p67
    %p69 = scmp.ne.s32.totalorder %s57, %s58
    %p70 = scmp.eq.s32.totalorder %s15, 1
    %p71 = por %p69, %p70
    %p73 = scmp.ne.s32.totalorder %s58, %s72
    %p74 = scmp.eq.s32.totalorder %s15, 0
    %p75 = por %p73, %p74
    %s77 = sadd.s32 %s76, 1
    %p80 = scmp.eq.s32.totalorder %s9, 1
    %p81 = scmp.ne.s32.totalorder %s76, %s78
    %p82 = scmp.eq.s32.totalorder %s9, 0
    %p83 = por %p81, %p82
    %p84 = scmp.ne.s32.totalorder %s76, %s78
    %p85 = scmp.eq.s32.totalorder %s14, 1
    %p86 = por %p84, %p85
    %p87 = scmp.ne.s32.totalorder %s78, %s79
    %p88 = scmp.eq.s32.totalorder %s14, 0
    %p89 = por %p87, %p88
    %p90 = scmp.ne.s32.totalorder %s78, %s79
    %p91 = scmp.eq.s32.totalorder %s15, 1
    %p92 = por %p90, %p91
    %p94 = scmp.ne.s32.totalorder %s79, %s93
    %p95 = scmp.eq.s32.totalorder %s15, 0
    %p96 = por %p94, %p95
    %s97 = ssub.s32 %s16, %s28
    %s98 = ssub.s32 %s17, %s24
    %s99 = sor.u32 %s97, %s98
    %p100 = scmp.eq.s32.totalorder %s99, 0
    %s102 = sadd.s32 %s101, 1
    %s103 = scalar_select %p100, %s101, %s102
    %p106 = pneg %p100
    %p107 = scmp.eq.s32.totalorder %s9, 1
    %p108 = por %p106, %p107
    %p109 = scmp.ne.s32.totalorder %s101, %s104
    %p110 = scmp.eq.s32.totalorder %s9, 0
    %p111 = por %p109, %p110
    %p112 = scmp.ne.s32.totalorder %s101, %s104
    %p113 = scmp.eq.s32.totalorder %s14, 1
    %p114 = por %p112, %p113
    %p115 = scmp.ne.s32.totalorder %s104, %s105
    %p116 = scmp.eq.s32.totalorder %s14, 0
    %p117 = por %p115, %p116
    %p118 = scmp.ne.s32.totalorder %s104, %s105
    %p119 = scmp.eq.s32.totalorder %s15, 1
    %p120 = por %p118, %p119
    %p122 = scmp.ne.s32.totalorder %s105, %s121
    %p123 = scmp.eq.s32.totalorder %s15, 0
    %p124 = por %p122, %p123
    %p125 = scmp.le.s32.totalorder 1, %s9
    %p126 = scmp.lt.s32.totalorder %s9, 3
    %p127 = pnand %p125, %p126
    %p128 = pneg %p127
    // Predicated region
    $region9: #{bottleneck_forward.4} parent=5 // pred_check
      _
    $region10: #{bottleneck_forward.4} parent=5 // pred_check_branch
      %130 = sbr.rel (%p127) target = $region12
    $region11: #{bottleneck_forward.4} parent=5 // pred_region
      %s131 = ssub.s32 %s9, 1
      // Predicated region
      $region13: #{bottleneck_forward.4} parent=11 // pred_check
        %p132 = pneg %p68
      $region14: #{bottleneck_forward.4} parent=11 // pred_check_branch
        %134 = sbr.rel (%p132) target = $region16
      $region15: #{bottleneck_forward.4} parent=11 // pred_region
        _
      $region16: #{bottleneck_forward.4} parent=11 // pred_fallthru
        _
      // Predicated region
      $region17: #{bottleneck_forward.4} parent=11 // pred_check
        %p135 = pneg %p89
      $region18: #{bottleneck_forward.4} parent=11 // pred_check_branch
        %137 = sbr.rel (%p135) target = $region20
      $region19: #{bottleneck_forward.4} parent=11 // pred_region
        _
      $region20: #{bottleneck_forward.4} parent=11 // pred_fallthru
        _
    $region12: #{bottleneck_forward.4} parent=5 // pred_fallthru
      _
    %p138 = scmp.lt.s32.totalorder %s9, 2
    // Predicated region
    $region21: #{bottleneck_forward.4} parent=5 // pred_check
      %p139 = pneg %p138
    $region22: #{bottleneck_forward.4} parent=5 // pred_check_branch
      %141 = sbr.rel (%p139) target = $region24
    $region23: #{bottleneck_forward.4} parent=5 // pred_region
      // Predicated region
      $region25: #{bottleneck_forward.4} parent=23 // pred_check
        %p142 = pneg %p41
      $region26: #{bottleneck_forward.4} parent=23 // pred_check_branch
        %144 = sbr.rel (%p142) target = $region28
      $region27: #{bottleneck_forward.4} parent=23 // pred_region
        %s145 = smul.u32 4, %s16
        %p146 = scmp.lt.s32.totalorder %s145, 7
        %s147 = scalar_select %p146, %s145, 7
        %s148 = smul.addr %s147, 18
        %s149 = smul.addr %s148, 4
        %s150 = scalar_lea.vmem %s0, %s149
        %s151 = smul.u32 4, %s16
      $region28: #{bottleneck_forward.4} parent=23 // pred_fallthru
        _
    $region24: #{bottleneck_forward.4} parent=5 // pred_fallthru
      _
    %p152 = scmp.le.s32.totalorder 1, %s9
    %p153 = scmp.lt.s32.totalorder %s9, 3
    %p154 = pnand %p152, %p153
    %p155 = pneg %p154
    // Predicated region
    $region29: #{bottleneck_forward.4} parent=5 // pred_check
      _
    $region30: #{bottleneck_forward.4} parent=5 // pred_check_branch
      %157 = sbr.rel (%p154) target = $region32
    $region31: #{bottleneck_forward.4} parent=5 // pred_region
      %s158 = ssub.s32 %s9, 1
      %s159 = smul.u32 4, %s18
      %p160 = scmp.lt.s32.totalorder %s159, 7
      %s161 = scalar_select %p160, %s159, 7
      %s162 = smul.addr %s161, 18
      %s163 = smul.addr %s162, 4
      %s164 = scalar_lea.vmem %s0, %s163
      %p165 = pneg %p47
      %p166 = pneg %p44
      %p167 = pneg %p68
      %p168 = pneg %p65
      %p169 = pneg %p89
      %p170 = pneg %p86
      %p171 = pneg %p117
      %p172 = pneg %p114
      %s173 = smul.u32 8, %s19
      %p174 = scmp.lt.s32.totalorder %s18, 1
      %s175 = scalar_select %p174, %s18, 1
      %p176 = scmp.lt.s32.totalorder %s173, 7
      %s177 = scalar_select %p176, %s173, 7
      %s178 = smul.addr %s175, 8
      %s179 = sadd.s32 %s177, %s178
      %s180 = smul.addr %s179, 4
      %s181 = scalar_lea.vmem %s3, %s180
      %s182 = smul.u32 4, %s18
      %p183 = scmp.lt.s32.totalorder %s182, 7
      %s184 = scalar_select %p183, %s182, 7
      %s185 = smul.addr %s184, 18
      %s186 = smul.addr %s185, 4
      %s187 = scalar_lea.vmem %s0, %s186
      %s188 = smul.u32 4, %s18
      %s189 = smul.u32 8, %s19
      %p190 = scmp.lt.s32.totalorder %s18, 1
      %s191 = scalar_select %p190, %s18, 1
      %p192 = scmp.lt.s32.totalorder %s189, 7
      %s193 = scalar_select %p192, %s189, 7
      %s194 = smul.addr %s191, 8
      %s195 = sadd.s32 %s193, %s194
      %s196 = smul.addr %s195, 4
      %s197 = scalar_lea.vmem %s3, %s196
      %s198 = smul.u32 8, %s19
      %s200 = smul.u32 %s19, 8
      %s201 = smul.u32 %s200, 2
      %s202 = smul.addr %s201, 4
      %s203 = scalar_lea.vmem %s187, %s202
      %v204 = vld [vmem:[%s203] sm:$0xf]
      %v205 = vld [vmem:[%s203 + $0x8] sm:$0xf]
      %v206 = vld [vmem:[%s203 + $0x10] sm:$0xf]
      %v207 = vld [vmem:[%s203 + $0x18] sm:$0xf]
      %v208 = vld [vmem:[%s203 + $0x20] sm:$0xf]
      %v209 = vld [vmem:[%s203 + $0x28] sm:$0xf]
      %v210 = vld [vmem:[%s203 + $0x30] sm:$0xf]
      %v211 = vld [vmem:[%s203 + $0x38] sm:$0xf]
      %s212 = sadd.s32 %s201, 18
      %s213 = smul.addr %s212, 4
      %s214 = scalar_lea.vmem %s187, %s213
      %v215 = vld [vmem:[%s214] sm:$0xf]
      %v216 = vld [vmem:[%s214 + $0x8] sm:$0xf]
      %v217 = vld [vmem:[%s214 + $0x10] sm:$0xf]
      %v218 = vld [vmem:[%s214 + $0x18] sm:$0xf]
      %v219 = vld [vmem:[%s214 + $0x20] sm:$0xf]
      %v220 = vld [vmem:[%s214 + $0x28] sm:$0xf]
      %v221 = vld [vmem:[%s214 + $0x30] sm:$0xf]
      %v222 = vld [vmem:[%s214 + $0x38] sm:$0xf]
      %v223 = vld [vmem:[%s203 + $0x4] sm:$0x1]
      %v224 = vld [vmem:[%s203 + $0xc] sm:$0x1]
      %v225 = vld [vmem:[%s203 + $0x14] sm:$0x1]
      %v226 = vld [vmem:[%s203 + $0x1c] sm:$0x1]
      %v227 = vld [vmem:[%s203 + $0x24] sm:$0x1]
      %v228 = vld [vmem:[%s203 + $0x2c] sm:$0x1]
      %v229 = vld [vmem:[%s203 + $0x34] sm:$0x1]
      %v230 = vld [vmem:[%s203 + $0x3c] sm:$0x1]
      %vm231 = vsmask.f32 3328
      %vm232 = vsmask.f32 7440
      %vm233 = vmor %vm231, %vm232
      %v235 = vshrl.u32 %v204, 16
      %v237 = vrot.slane %v235, 4
      %v238 = vshll.u32 %v204, 16
      %v240 = vrot.slane %v238, 5
      %v241 = vor.u32 %v237, %v240
      %v242 = vrot.slane %v241, 4
      %v244 = vshll.u32 %v223, 16
      %v246 = vrot.slane %v244, 5
      %v247 = vsel %vm233, %v242, %v246
      %v249 = vshrl.u32 %v205, 16
      %v251 = vrot.slane %v249, 4
      %v252 = vshll.u32 %v205, 16
      %v254 = vrot.slane %v252, 5
      %v255 = vor.u32 %v251, %v254
      %v256 = vrot.slane %v255, 4
      %v258 = vshll.u32 %v224, 16
      %v260 = vrot.slane %v258, 5
      %v261 = vsel %vm233, %v256, %v260
      %v263 = vshrl.u32 %v206, 16
      %v265 = vrot.slane %v263, 4
      %v266 = vshll.u32 %v206, 16
      %v268 = vrot.slane %v266, 5
      %v269 = vor.u32 %v265, %v268
      %v270 = vrot.slane %v269, 4
      %v272 = vshll.u32 %v225, 16
      %v274 = vrot.slane %v272, 5
      %v275 = vsel %vm233, %v270, %v274
      %v277 = vshrl.u32 %v207, 16
      %v279 = vrot.slane %v277, 4
      %v280 = vshll.u32 %v207, 16
      %v282 = vrot.slane %v280, 5
      %v283 = vor.u32 %v279, %v282
      %v284 = vrot.slane %v283, 4
      %v286 = vshll.u32 %v226, 16
      %v288 = vrot.slane %v286, 5
      %v289 = vsel %vm233, %v284, %v288
      %v291 = vshrl.u32 %v208, 16
      %v293 = vrot.slane %v291, 4
      %v294 = vshll.u32 %v208, 16
      %v296 = vrot.slane %v294, 5
      %v297 = vor.u32 %v293, %v296
      %v298 = vrot.slane %v297, 4
      %v300 = vshll.u32 %v227, 16
      %v302 = vrot.slane %v300, 5
      %v303 = vsel %vm233, %v298, %v302
      %v305 = vshrl.u32 %v209, 16
      %v307 = vrot.slane %v305, 4
      %v308 = vshll.u32 %v209, 16
      %v310 = vrot.slane %v308, 5
      %v311 = vor.u32 %v307, %v310
      %v312 = vrot.slane %v311, 4
      %v314 = vshll.u32 %v228, 16
      %v316 = vrot.slane %v314, 5
      %v317 = vsel %vm233, %v312, %v316
      %v319 = vshrl.u32 %v210, 16
      %v321 = vrot.slane %v319, 4
      %v322 = vshll.u32 %v210, 16
      %v324 = vrot.slane %v322, 5
      %v325 = vor.u32 %v321, %v324
      %v326 = vrot.slane %v325, 4
      %v328 = vshll.u32 %v229, 16
      %v330 = vrot.slane %v328, 5
      %v331 = vsel %vm233, %v326, %v330
      %v333 = vshrl.u32 %v211, 16
      %v335 = vrot.slane %v333, 4
      %v336 = vshll.u32 %v211, 16
      %v338 = vrot.slane %v336, 5
      %v339 = vor.u32 %v335, %v338
      %v340 = vrot.slane %v339, 4
      %v342 = vshll.u32 %v230, 16
      %v344 = vrot.slane %v342, 5
      %v345 = vsel %vm233, %v340, %v344
      %s346 = sadd.s32 %s201, 36
      %s347 = smul.addr %s346, 4
      %s348 = scalar_lea.vmem %s187, %s347
      %v349 = vld [vmem:[%s348] sm:$0xf]
      %v350 = vld [vmem:[%s348 + $0x8] sm:$0xf]
      %v351 = vld [vmem:[%s348 + $0x10] sm:$0xf]
      %v352 = vld [vmem:[%s348 + $0x18] sm:$0xf]
      %v353 = vld [vmem:[%s348 + $0x20] sm:$0xf]
      %v354 = vld [vmem:[%s348 + $0x28] sm:$0xf]
      %v355 = vld [vmem:[%s348 + $0x30] sm:$0xf]
      %v356 = vld [vmem:[%s348 + $0x38] sm:$0xf]
      %s357 = sadd.s32 %s201, 54
      %s358 = smul.addr %s357, 4
      %s359 = scalar_lea.vmem %s187, %s358
      %v360 = vld [vmem:[%s359] sm:$0xf]
      %v361 = vld [vmem:[%s359 + $0x8] sm:$0xf]
      %v362 = vld [vmem:[%s359 + $0x10] sm:$0xf]
      %v363 = vld [vmem:[%s359 + $0x18] sm:$0xf]
      %v364 = vld [vmem:[%s359 + $0x20] sm:$0xf]
      %v365 = vld [vmem:[%s359 + $0x28] sm:$0xf]
      %v366 = vld [vmem:[%s359 + $0x30] sm:$0xf]
      %v367 = vld [vmem:[%s359 + $0x38] sm:$0xf]
      %v368 = vld [vmem:[%s348 + $0x4] sm:$0x1]
      %v369 = vld [vmem:[%s348 + $0xc] sm:$0x1]
      %v370 = vld [vmem:[%s348 + $0x14] sm:$0x1]
      %v371 = vld [vmem:[%s348 + $0x1c] sm:$0x1]
      %v372 = vld [vmem:[%s348 + $0x24] sm:$0x1]
      %v373 = vld [vmem:[%s348 + $0x2c] sm:$0x1]
      %v374 = vld [vmem:[%s348 + $0x34] sm:$0x1]
      %v375 = vld [vmem:[%s348 + $0x3c] sm:$0x1]
      %v377 = vshrl.u32 %v349, 16
      %v379 = vrot.slane %v377, 4
      %v380 = vshll.u32 %v349, 16
      %v382 = vrot.slane %v380, 5
      %v383 = vor.u32 %v379, %v382
      %v384 = vrot.slane %v383, 4
      %v386 = vshll.u32 %v368, 16
      %v388 = vrot.slane %v386, 5
      %v389 = vsel %vm233, %v384, %v388
      %v391 = vshrl.u32 %v350, 16
      %v393 = vrot.slane %v391, 4
      %v394 = vshll.u32 %v350, 16
      %v396 = vrot.slane %v394, 5
      %v397 = vor.u32 %v393, %v396
      %v398 = vrot.slane %v397, 4
      %v400 = vshll.u32 %v369, 16
      %v402 = vrot.slane %v400, 5
      %v403 = vsel %vm233, %v398, %v402
      %v405 = vshrl.u32 %v351, 16
      %v407 = vrot.slane %v405, 4
      %v408 = vshll.u32 %v351, 16
      %v410 = vrot.slane %v408, 5
      %v411 = vor.u32 %v407, %v410
      %v412 = vrot.slane %v411, 4
      %v414 = vshll.u32 %v370, 16
      %v416 = vrot.slane %v414, 5
      %v417 = vsel %vm233, %v412, %v416
      %v419 = vshrl.u32 %v352, 16
      %v421 = vrot.slane %v419, 4
      %v422 = vshll.u32 %v352, 16
      %v424 = vrot.slane %v422, 5
      %v425 = vor.u32 %v421, %v424
      %v426 = vrot.slane %v425, 4
      %v428 = vshll.u32 %v371, 16
      %v430 = vrot.slane %v428, 5
      %v431 = vsel %vm233, %v426, %v430
      %v433 = vshrl.u32 %v353, 16
      %v435 = vrot.slane %v433, 4
      %v436 = vshll.u32 %v353, 16
      %v438 = vrot.slane %v436, 5
      %v439 = vor.u32 %v435, %v438
      %v440 = vrot.slane %v439, 4
      %v442 = vshll.u32 %v372, 16
      %v444 = vrot.slane %v442, 5
      %v445 = vsel %vm233, %v440, %v444
      %v447 = vshrl.u32 %v354, 16
      %v449 = vrot.slane %v447, 4
      %v450 = vshll.u32 %v354, 16
      %v452 = vrot.slane %v450, 5
      %v453 = vor.u32 %v449, %v452
      %v454 = vrot.slane %v453, 4
      %v456 = vshll.u32 %v373, 16
      %v458 = vrot.slane %v456, 5
      %v459 = vsel %vm233, %v454, %v458
      %v461 = vshrl.u32 %v355, 16
      %v463 = vrot.slane %v461, 4
      %v464 = vshll.u32 %v355, 16
      %v466 = vrot.slane %v464, 5
      %v467 = vor.u32 %v463, %v466
      %v468 = vrot.slane %v467, 4
      %v470 = vshll.u32 %v374, 16
      %v472 = vrot.slane %v470, 5
      %v473 = vsel %vm233, %v468, %v472
      %v475 = vshrl.u32 %v356, 16
      %v477 = vrot.slane %v475, 4
      %v478 = vshll.u32 %v356, 16
      %v480 = vrot.slane %v478, 5
      %v481 = vor.u32 %v477, %v480
      %v482 = vrot.slane %v481, 4
      %v484 = vshll.u32 %v375, 16
      %v486 = vrot.slane %v484, 5
      %v487 = vsel %vm233, %v482, %v486
      %s488 = sadd.s32 %s200, 1
      %s489 = smul.u32 %s488, 2
      %s490 = smul.addr %s489, 4
      %s491 = scalar_lea.vmem %s187, %s490
      %v492 = vld [vmem:[%s491] sm:$0xf]
      %v493 = vld [vmem:[%s491 + $0x8] sm:$0xf]
      %v494 = vld [vmem:[%s491 + $0x10] sm:$0xf]
      %v495 = vld [vmem:[%s491 + $0x18] sm:$0xf]
      %v496 = vld [vmem:[%s491 + $0x20] sm:$0xf]
      %v497 = vld [vmem:[%s491 + $0x28] sm:$0xf]
      %v498 = vld [vmem:[%s491 + $0x30] sm:$0xf]
      %v499 = vld [vmem:[%s491 + $0x38] sm:$0xf]
      %s500 = sadd.s32 %s489, 18
      %s501 = smul.addr %s500, 4
      %s502 = scalar_lea.vmem %s187, %s501
      %v503 = vld [vmem:[%s502] sm:$0xf]
      %v504 = vld [vmem:[%s502 + $0x8] sm:$0xf]
      %v505 = vld [vmem:[%s502 + $0x10] sm:$0xf]
      %v506 = vld [vmem:[%s502 + $0x18] sm:$0xf]
      %v507 = vld [vmem:[%s502 + $0x20] sm:$0xf]
      %v508 = vld [vmem:[%s502 + $0x28] sm:$0xf]
      %v509 = vld [vmem:[%s502 + $0x30] sm:$0xf]
      %v510 = vld [vmem:[%s502 + $0x38] sm:$0xf]
      %v511 = vld [vmem:[%s491 + $0x4] sm:$0x1]
      %v512 = vld [vmem:[%s491 + $0xc] sm:$0x1]
      %v513 = vld [vmem:[%s491 + $0x14] sm:$0x1]
      %v514 = vld [vmem:[%s491 + $0x1c] sm:$0x1]
      %v515 = vld [vmem:[%s491 + $0x24] sm:$0x1]
      %v516 = vld [vmem:[%s491 + $0x2c] sm:$0x1]
      %v517 = vld [vmem:[%s491 + $0x34] sm:$0x1]
      %v518 = vld [vmem:[%s491 + $0x3c] sm:$0x1]
      %v520 = vshrl.u32 %v492, 16
      %v522 = vrot.slane %v520, 4
      %v523 = vshll.u32 %v492, 16
      %v525 = vrot.slane %v523, 5
      %v526 = vor.u32 %v522, %v525
      %v527 = vrot.slane %v526, 4
      %v529 = vshll.u32 %v511, 16
      %v531 = vrot.slane %v529, 5
      %v532 = vsel %vm233, %v527, %v531
      %v534 = vshrl.u32 %v493, 16
      %v536 = vrot.slane %v534, 4
      %v537 = vshll.u32 %v493, 16
      %v539 = vrot.slane %v537, 5
      %v540 = vor.u32 %v536, %v539
      %v541 = vrot.slane %v540, 4
      %v543 = vshll.u32 %v512, 16
      %v545 = vrot.slane %v543, 5
      %v546 = vsel %vm233, %v541, %v545
      %v548 = vshrl.u32 %v494, 16
      %v550 = vrot.slane %v548, 4
      %v551 = vshll.u32 %v494, 16
      %v553 = vrot.slane %v551, 5
      %v554 = vor.u32 %v550, %v553
      %v555 = vrot.slane %v554, 4
      %v557 = vshll.u32 %v513, 16
      %v559 = vrot.slane %v557, 5
      %v560 = vsel %vm233, %v555, %v559
      %v562 = vshrl.u32 %v495, 16
      %v564 = vrot.slane %v562, 4
      %v565 = vshll.u32 %v495, 16
      %v567 = vrot.slane %v565, 5
      %v568 = vor.u32 %v564, %v567
      %v569 = vrot.slane %v568, 4
      %v571 = vshll.u32 %v514, 16
      %v573 = vrot.slane %v571, 5
      %v574 = vsel %vm233, %v569, %v573
      %v576 = vshrl.u32 %v496, 16
      %v578 = vrot.slane %v576, 4
      %v579 = vshll.u32 %v496, 16
      %v581 = vrot.slane %v579, 5
      %v582 = vor.u32 %v578, %v581
      %v583 = vrot.slane %v582, 4
      %v585 = vshll.u32 %v515, 16
      %v587 = vrot.slane %v585, 5
      %v588 = vsel %vm233, %v583, %v587
      %v590 = vshrl.u32 %v497, 16
      %v592 = vrot.slane %v590, 4
      %v593 = vshll.u32 %v497, 16
      %v595 = vrot.slane %v593, 5
      %v596 = vor.u32 %v592, %v595
      %v597 = vrot.slane %v596, 4
      %v599 = vshll.u32 %v516, 16
      %v601 = vrot.slane %v599, 5
      %v602 = vsel %vm233, %v597, %v601
      %v604 = vshrl.u32 %v498, 16
      %v606 = vrot.slane %v604, 4
      %v607 = vshll.u32 %v498, 16
      %v609 = vrot.slane %v607, 5
      %v610 = vor.u32 %v606, %v609
      %v611 = vrot.slane %v610, 4
      %v613 = vshll.u32 %v517, 16
      %v615 = vrot.slane %v613, 5
      %v616 = vsel %vm233, %v611, %v615
      %v618 = vshrl.u32 %v499, 16
      %v620 = vrot.slane %v618, 4
      %v621 = vshll.u32 %v499, 16
      %v623 = vrot.slane %v621, 5
      %v624 = vor.u32 %v620, %v623
      %v625 = vrot.slane %v624, 4
      %v627 = vshll.u32 %v518, 16
      %v629 = vrot.slane %v627, 5
      %v630 = vsel %vm233, %v625, %v629
      %v631 = vld [vmem:[%s1] sm:$0x3]
      %s632 = scalar_lea.vmem %s1, 2
      %v633 = vld [vmem:[%s632] sm:$0x3]
      %v642 = vunpack.c.l.b16 %v215
      %v643 = vunpack.c.l.b16 %v216
      %v644 = vunpack.c.l.b16 %v217
      %v645 = vunpack.c.l.b16 %v218
      %v646 = vunpack.c.l.b16 %v219
      %v647 = vunpack.c.l.b16 %v220
      %v648 = vunpack.c.l.b16 %v221
      %v649 = vunpack.c.l.b16 %v222
      %v650 = vpack.c.b16 %v643, %v642
      %v651 = vpack.c.b16 %v645, %v644
      %v652 = vpack.c.b16 %v647, %v646
      %v653 = vpack.c.b16 %v649, %v648
      %vm654 = vcmask 31744
      %v656 = vsel %vm654, %v650, 0
      %v659 = vsel %vm654, %v651, 0
      %v662 = vsel %vm654, %v652, 0
      %v665 = vsel %vm654, %v653, 0
      %vm667 = vcmask 1041408
      %v669 = vsel %vm667, %v633, 0
      %671 = vmatpush.bf16.msra.mxu0 0
      %672 = vmatpush.bf16.msra.mxu0 0
      %673 = vmatpush.bf16.msra.mxu0 0
      %674 = vmatpush.bf16.msra.mxu0 0
      %675 = vmatpush.bf16.msra.mxu0 0
      %676 = vmatpush.bf16.msra.mxu0 0
      %677 = vmatpush.bf16.msra.mxu0 0
      %678 = vmatpush.bf16.msra.mxu0 %v669
      %679 = vmatmul.bf16.gmra.mxu0 %v656
      %v680 = vpop.f32.mrf.mxu0
      %v681 = vadd.f32 0.0, %v680
      %v682 = vpop.f32.mrf.mxu0
      %v683 = vadd.f32 0.0, %v682
      %684 = vmatmul.bf16.gmra.mxu0 %v659
      %v685 = vpop.f32.mrf.mxu0
      %v686 = vadd.f32 0.0, %v685
      %v687 = vpop.f32.mrf.mxu0
      %v688 = vadd.f32 0.0, %v687
      %689 = vmatmul.bf16.gmra.mxu0 %v662
      %v690 = vpop.f32.mrf.mxu0
      %v691 = vadd.f32 0.0, %v690
      %v692 = vpop.f32.mrf.mxu0
      %v693 = vadd.f32 0.0, %v692
      %694 = vmatmul.bf16.gmra.mxu0 %v665
      %v695 = vpop.f32.mrf.mxu0
      %v696 = vadd.f32 0.0, %v695
      %v697 = vpop.f32.mrf.mxu0
      %v698 = vadd.f32 0.0, %v697
      %699 = vdwg.mxu0
      %v708 = vunpack.c.l.b16 %v204
      %v709 = vunpack.c.l.b16 %v205
      %v710 = vunpack.c.l.b16 %v206
      %v711 = vunpack.c.l.b16 %v207
      %v712 = vunpack.c.l.b16 %v208
      %v713 = vunpack.c.l.b16 %v209
      %v714 = vunpack.c.l.b16 %v210
      %v715 = vunpack.c.l.b16 %v211
      %v716 = vpack.c.b16 %v709, %v708
      %v717 = vpack.c.b16 %v711, %v710
      %v718 = vpack.c.b16 %v713, %v712
      %v719 = vpack.c.b16 %v715, %v714
      %v721 = vsel %vm654, %v716, 0
      %v724 = vsel %vm654, %v717, 0
      %v727 = vsel %vm654, %v718, 0
      %v730 = vsel %vm654, %v719, 0
      %v733 = vsel %vm667, %v631, 0
      %735 = vmatpush.bf16.msra.mxu0 0
      %736 = vmatpush.bf16.msra.mxu0 0
      %737 = vmatpush.bf16.msra.mxu0 0
      %738 = vmatpush.bf16.msra.mxu0 0
      %739 = vmatpush.bf16.msra.mxu0 0
      %740 = vmatpush.bf16.msra.mxu0 0
      %741 = vmatpush.bf16.msra.mxu0 0
      %742 = vmatpush.bf16.msra.mxu0 %v733
      %743 = vmatmul.bf16.gmra.mxu0 %v721
      %v744 = vpop.f32.mrf.mxu0
      %v745 = vadd.f32 %v681, %v744
      %v746 = vpop.f32.mrf.mxu0
      %v747 = vadd.f32 %v683, %v746
      %748 = vmatmul.bf16.gmra.mxu0 %v724
      %v749 = vpop.f32.mrf.mxu0
      %v750 = vadd.f32 %v686, %v749
      %v751 = vpop.f32.mrf.mxu0
      %v752 = vadd.f32 %v688, %v751
      %753 = vmatmul.bf16.gmra.mxu0 %v727
      %v754 = vpop.f32.mrf.mxu0
      %v755 = vadd.f32 %v691, %v754
      %v756 = vpop.f32.mrf.mxu0
      %v757 = vadd.f32 %v693, %v756
      %758 = vmatmul.bf16.gmra.mxu0 %v730
      %v759 = vpop.f32.mrf.mxu0
      %v760 = vadd.f32 %v696, %v759
      %v761 = vpop.f32.mrf.mxu0
      %v762 = vadd.f32 %v698, %v761
      %763 = vdwg.mxu0
      %s764 = scalar_lea.vmem %s1, 4
      %v765 = vld [vmem:[%s764] sm:$0x3]
      %v766 = vunpack.c.l.b16 %v247
      %v767 = vunpack.c.l.b16 %v261
      %v768 = vunpack.c.l.b16 %v275
      %v769 = vunpack.c.l.b16 %v289
      %v770 = vunpack.c.l.b16 %v303
      %v771 = vunpack.c.l.b16 %v317
      %v772 = vunpack.c.l.b16 %v331
      %v773 = vunpack.c.l.b16 %v345
      %v774 = vpack.c.b16 %v767, %v766
      %v775 = vpack.c.b16 %v769, %v768
      %v776 = vpack.c.b16 %v771, %v770
      %v777 = vpack.c.b16 %v773, %v772
      %v779 = vsel %vm654, %v774, 0
      %v782 = vsel %vm654, %v775, 0
      %v785 = vsel %vm654, %v776, 0
      %v788 = vsel %vm654, %v777, 0
      %v791 = vsel %vm667, %v765, 0
      %793 = vmatpush.bf16.msra.mxu0 0
      %794 = vmatpush.bf16.msra.mxu0 0
      %795 = vmatpush.bf16.msra.mxu0 0
      %796 = vmatpush.bf16.msra.mxu0 0
      %797 = vmatpush.bf16.msra.mxu0 0
      %798 = vmatpush.bf16.msra.mxu0 0
      %799 = vmatpush.bf16.msra.mxu0 0
      %800 = vmatpush.bf16.msra.mxu0 %v791
      %801 = vmatmul.bf16.gmra.mxu0 %v779
      %v802 = vpop.f32.mrf.mxu0
      %v803 = vadd.f32 0.0, %v802
      %v804 = vpop.f32.mrf.mxu0
      %v805 = vadd.f32 0.0, %v804
      %806 = vmatmul.bf16.gmra.mxu0 %v782
      %v807 = vpop.f32.mrf.mxu0
      %v808 = vadd.f32 0.0, %v807
      %v809 = vpop.f32.mrf.mxu0
      %v810 = vadd.f32 0.0, %v809
      %811 = vmatmul.bf16.gmra.mxu0 %v785
      %v812 = vpop.f32.mrf.mxu0
      %v813 = vadd.f32 0.0, %v812
      %v814 = vpop.f32.mrf.mxu0
      %v815 = vadd.f32 0.0, %v814
      %816 = vmatmul.bf16.gmra.mxu0 %v788
      %v817 = vpop.f32.mrf.mxu0
      %v818 = vadd.f32 0.0, %v817
      %v819 = vpop.f32.mrf.mxu0
      %v820 = vadd.f32 0.0, %v819
      %821 = vdwg.mxu0
      %v822 = vadd.f32 %v745, %v803
      %v823 = vadd.f32 %v747, %v805
      %v824 = vadd.f32 %v750, %v808
      %v825 = vadd.f32 %v752, %v810
      %v826 = vadd.f32 %v755, %v813
      %v827 = vadd.f32 %v757, %v815
      %v828 = vadd.f32 %v760, %v818
      %v829 = vadd.f32 %v762, %v820
      %s830 = scalar_lea.vmem %s1, 6
      %v831 = vld [vmem:[%s830] sm:$0x3]
      %v840 = vunpack.c.l.b16 %v349
      %v841 = vunpack.c.l.b16 %v350
      %v842 = vunpack.c.l.b16 %v351
      %v843 = vunpack.c.l.b16 %v352
      %v844 = vunpack.c.l.b16 %v353
      %v845 = vunpack.c.l.b16 %v354
      %v846 = vunpack.c.l.b16 %v355
      %v847 = vunpack.c.l.b16 %v356
      %v848 = vpack.c.b16 %v841, %v840
      %v849 = vpack.c.b16 %v843, %v842
      %v850 = vpack.c.b16 %v845, %v844
      %v851 = vpack.c.b16 %v847, %v846
      %v853 = vsel %vm654, %v848, 0
      %v856 = vsel %vm654, %v849, 0
      %v859 = vsel %vm654, %v850, 0
      %v862 = vsel %vm654, %v851, 0
      %v865 = vsel %vm667, %v831, 0
      %867 = vmatpush.bf16.msra.mxu0 0
      %868 = vmatpush.bf16.msra.mxu0 0
      %869 = vmatpush.bf16.msra.mxu0 0
      %870 = vmatpush.bf16.msra.mxu0 0
      %871 = vmatpush.bf16.msra.mxu0 0
      %872 = vmatpush.bf16.msra.mxu0 0
      %873 = vmatpush.bf16.msra.mxu0 0
      %874 = vmatpush.bf16.msra.mxu0 %v865
      %875 = vmatmul.bf16.gmra.mxu0 %v853
      %v876 = vpop.f32.mrf.mxu0
      %v877 = vadd.f32 0.0, %v876
      %v878 = vpop.f32.mrf.mxu0
      %v879 = vadd.f32 0.0, %v878
      %880 = vmatmul.bf16.gmra.mxu0 %v856
      %v881 = vpop.f32.mrf.mxu0
      %v882 = vadd.f32 0.0, %v881
      %v883 = vpop.f32.mrf.mxu0
      %v884 = vadd.f32 0.0, %v883
      %885 = vmatmul.bf16.gmra.mxu0 %v859
      %v886 = vpop.f32.mrf.mxu0
      %v887 = vadd.f32 0.0, %v886
      %v888 = vpop.f32.mrf.mxu0
      %v889 = vadd.f32 0.0, %v888
      %890 = vmatmul.bf16.gmra.mxu0 %v862
      %v891 = vpop.f32.mrf.mxu0
      %v892 = vadd.f32 0.0, %v891
      %v893 = vpop.f32.mrf.mxu0
      %v894 = vadd.f32 0.0, %v893
      %895 = vdwg.mxu0
      %v896 = vadd.f32 %v822, %v877
      %v897 = vadd.f32 %v823, %v879
      %v898 = vadd.f32 %v824, %v882
      %v899 = vadd.f32 %v825, %v884
      %v900 = vadd.f32 %v826, %v887
      %v901 = vadd.f32 %v827, %v889
      %v902 = vadd.f32 %v828, %v892
      %v903 = vadd.f32 %v829, %v894
      %s904 = scalar_lea.vmem %s1, 8
      %v905 = vld [vmem:[%s904] sm:$0x3]
      %v914 = vunpack.c.l.b16 %v360
      %v915 = vunpack.c.l.b16 %v361
      %v916 = vunpack.c.l.b16 %v362
      %v917 = vunpack.c.l.b16 %v363
      %v918 = vunpack.c.l.b16 %v364
      %v919 = vunpack.c.l.b16 %v365
      %v920 = vunpack.c.l.b16 %v366
      %v921 = vunpack.c.l.b16 %v367
      %v922 = vpack.c.b16 %v915, %v914
      %v923 = vpack.c.b16 %v917, %v916
      %v924 = vpack.c.b16 %v919, %v918
      %v925 = vpack.c.b16 %v921, %v920
      %v927 = vsel %vm654, %v922, 0
      %v930 = vsel %vm654, %v923, 0
      %v933 = vsel %vm654, %v924, 0
      %v936 = vsel %vm654, %v925, 0
      %v939 = vsel %vm667, %v905, 0
      %941 = vmatpush.bf16.msra.mxu0 0
      %942 = vmatpush.bf16.msra.mxu0 0
      %943 = vmatpush.bf16.msra.mxu0 0
      %944 = vmatpush.bf16.msra.mxu0 0
      %945 = vmatpush.bf16.msra.mxu0 0
      %946 = vmatpush.bf16.msra.mxu0 0
      %947 = vmatpush.bf16.msra.mxu0 0
      %948 = vmatpush.bf16.msra.mxu0 %v939
      %949 = vmatmul.bf16.gmra.mxu0 %v927
      %v950 = vpop.f32.mrf.mxu0
      %v951 = vadd.f32 0.0, %v950
      %v952 = vpop.f32.mrf.mxu0
      %v953 = vadd.f32 0.0, %v952
      %954 = vmatmul.bf16.gmra.mxu0 %v930
      %v955 = vpop.f32.mrf.mxu0
      %v956 = vadd.f32 0.0, %v955
      %v957 = vpop.f32.mrf.mxu0
      %v958 = vadd.f32 0.0, %v957
      %959 = vmatmul.bf16.gmra.mxu0 %v933
      %v960 = vpop.f32.mrf.mxu0
      %v961 = vadd.f32 0.0, %v960
      %v962 = vpop.f32.mrf.mxu0
      %v963 = vadd.f32 0.0, %v962
      %964 = vmatmul.bf16.gmra.mxu0 %v936
      %v965 = vpop.f32.mrf.mxu0
      %v966 = vadd.f32 0.0, %v965
      %v967 = vpop.f32.mrf.mxu0
      %v968 = vadd.f32 0.0, %v967
      %969 = vdwg.mxu0
      %v970 = vadd.f32 %v896, %v951
      %v971 = vadd.f32 %v897, %v953
      %v972 = vadd.f32 %v898, %v956
      %v973 = vadd.f32 %v899, %v958
      %v974 = vadd.f32 %v900, %v961
      %v975 = vadd.f32 %v901, %v963
      %v976 = vadd.f32 %v902, %v966
      %v977 = vadd.f32 %v903, %v968
      %s978 = scalar_lea.vmem %s1, 10
      %v979 = vld [vmem:[%s978] sm:$0x3]
      %v980 = vunpack.c.l.b16 %v389
      %v981 = vunpack.c.l.b16 %v403
      %v982 = vunpack.c.l.b16 %v417
      %v983 = vunpack.c.l.b16 %v431
      %v984 = vunpack.c.l.b16 %v445
      %v985 = vunpack.c.l.b16 %v459
      %v986 = vunpack.c.l.b16 %v473
      %v987 = vunpack.c.l.b16 %v487
      %v988 = vpack.c.b16 %v981, %v980
      %v989 = vpack.c.b16 %v983, %v982
      %v990 = vpack.c.b16 %v985, %v984
      %v991 = vpack.c.b16 %v987, %v986
      %v993 = vsel %vm654, %v988, 0
      %v996 = vsel %vm654, %v989, 0
      %v999 = vsel %vm654, %v990, 0
      %v1002 = vsel %vm654, %v991, 0
      %v1005 = vsel %vm667, %v979, 0
      %1007 = vmatpush.bf16.msra.mxu0 0
      %1008 = vmatpush.bf16.msra.mxu0 0
      %1009 = vmatpush.bf16.msra.mxu0 0
      %1010 = vmatpush.bf16.msra.mxu0 0
      %1011 = vmatpush.bf16.msra.mxu0 0
      %1012 = vmatpush.bf16.msra.mxu0 0
      %1013 = vmatpush.bf16.msra.mxu0 0
      %1014 = vmatpush.bf16.msra.mxu0 %v1005
      %1015 = vmatmul.bf16.gmra.mxu0 %v993
      %v1016 = vpop.f32.mrf.mxu0
      %v1017 = vadd.f32 0.0, %v1016
      %v1018 = vpop.f32.mrf.mxu0
      %v1019 = vadd.f32 0.0, %v1018
      %1020 = vmatmul.bf16.gmra.mxu0 %v996
      %v1021 = vpop.f32.mrf.mxu0
      %v1022 = vadd.f32 0.0, %v1021
      %v1023 = vpop.f32.mrf.mxu0
      %v1024 = vadd.f32 0.0, %v1023
      %1025 = vmatmul.bf16.gmra.mxu0 %v999
      %v1026 = vpop.f32.mrf.mxu0
      %v1027 = vadd.f32 0.0, %v1026
      %v1028 = vpop.f32.mrf.mxu0
      %v1029 = vadd.f32 0.0, %v1028
      %1030 = vmatmul.bf16.gmra.mxu0 %v1002
      %v1031 = vpop.f32.mrf.mxu0
      %v1032 = vadd.f32 0.0, %v1031
      %v1033 = vpop.f32.mrf.mxu0
      %v1034 = vadd.f32 0.0, %v1033
      %1035 = vdwg.mxu0
      %v1036 = vadd.f32 %v970, %v1017
      %v1037 = vadd.f32 %v971, %v1019
      %v1038 = vadd.f32 %v972, %v1022
      %v1039 = vadd.f32 %v973, %v1024
      %v1040 = vadd.f32 %v974, %v1027
      %v1041 = vadd.f32 %v975, %v1029
      %v1042 = vadd.f32 %v976, %v1032
      %v1043 = vadd.f32 %v977, %v1034
      %s1044 = scalar_lea.vmem %s1, 12
      %v1045 = vld [vmem:[%s1044] sm:$0x3]
      %v1054 = vunpack.c.l.b16 %v492
      %v1055 = vunpack.c.l.b16 %v493
      %v1056 = vunpack.c.l.b16 %v494
      %v1057 = vunpack.c.l.b16 %v495
      %v1058 = vunpack.c.l.b16 %v496
      %v1059 = vunpack.c.l.b16 %v497
      %v1060 = vunpack.c.l.b16 %v498
      %v1061 = vunpack.c.l.b16 %v499
      %v1062 = vpack.c.b16 %v1055, %v1054
      %v1063 = vpack.c.b16 %v1057, %v1056
      %v1064 = vpack.c.b16 %v1059, %v1058
      %v1065 = vpack.c.b16 %v1061, %v1060
      %v1067 = vsel %vm654, %v1062, 0
      %v1070 = vsel %vm654, %v1063, 0
      %v1073 = vsel %vm654, %v1064, 0
      %v1076 = vsel %vm654, %v1065, 0
      %v1079 = vsel %vm667, %v1045, 0
      %1081 = vmatpush.bf16.msra.mxu0 0
      %1082 = vmatpush.bf16.msra.mxu0 0
      %1083 = vmatpush.bf16.msra.mxu0 0
      %1084 = vmatpush.bf16.msra.mxu0 0
      %1085 = vmatpush.bf16.msra.mxu0 0
      %1086 = vmatpush.bf16.msra.mxu0 0
      %1087 = vmatpush.bf16.msra.mxu0 0
      %1088 = vmatpush.bf16.msra.mxu0 %v1079
      %1089 = vmatmul.bf16.gmra.mxu0 %v1067
      %v1090 = vpop.f32.mrf.mxu0
      %v1091 = vadd.f32 0.0, %v1090
      %v1092 = vpop.f32.mrf.mxu0
      %v1093 = vadd.f32 0.0, %v1092
      %1094 = vmatmul.bf16.gmra.mxu0 %v1070
      %v1095 = vpop.f32.mrf.mxu0
      %v1096 = vadd.f32 0.0, %v1095
      %v1097 = vpop.f32.mrf.mxu0
      %v1098 = vadd.f32 0.0, %v1097
      %1099 = vmatmul.bf16.gmra.mxu0 %v1073
      %v1100 = vpop.f32.mrf.mxu0
      %v1101 = vadd.f32 0.0, %v1100
      %v1102 = vpop.f32.mrf.mxu0
      %v1103 = vadd.f32 0.0, %v1102
      %1104 = vmatmul.bf16.gmra.mxu0 %v1076
      %v1105 = vpop.f32.mrf.mxu0
      %v1106 = vadd.f32 0.0, %v1105
      %v1107 = vpop.f32.mrf.mxu0
      %v1108 = vadd.f32 0.0, %v1107
      %1109 = vdwg.mxu0
      %v1110 = vadd.f32 %v1036, %v1091
      %v1111 = vadd.f32 %v1037, %v1093
      %v1112 = vadd.f32 %v1038, %v1096
      %v1113 = vadd.f32 %v1039, %v1098
      %v1114 = vadd.f32 %v1040, %v1101
      %v1115 = vadd.f32 %v1041, %v1103
      %v1116 = vadd.f32 %v1042, %v1106
      %v1117 = vadd.f32 %v1043, %v1108
      %s1118 = scalar_lea.vmem %s1, 14
      %v1119 = vld [vmem:[%s1118] sm:$0x3]
      %v1128 = vunpack.c.l.b16 %v503
      %v1129 = vunpack.c.l.b16 %v504
      %v1130 = vunpack.c.l.b16 %v505
      %v1131 = vunpack.c.l.b16 %v506
      %v1132 = vunpack.c.l.b16 %v507
      %v1133 = vunpack.c.l.b16 %v508
      %v1134 = vunpack.c.l.b16 %v509
      %v1135 = vunpack.c.l.b16 %v510
      %v1136 = vpack.c.b16 %v1129, %v1128
      %v1137 = vpack.c.b16 %v1131, %v1130
      %v1138 = vpack.c.b16 %v1133, %v1132
      %v1139 = vpack.c.b16 %v1135, %v1134
      %v1141 = vsel %vm654, %v1136, 0
      %v1144 = vsel %vm654, %v1137, 0
      %v1147 = vsel %vm654, %v1138, 0
      %v1150 = vsel %vm654, %v1139, 0
      %v1153 = vsel %vm667, %v1119, 0
      %1155 = vmatpush.bf16.msra.mxu0 0
      %1156 = vmatpush.bf16.msra.mxu0 0
      %1157 = vmatpush.bf16.msra.mxu0 0
      %1158 = vmatpush.bf16.msra.mxu0 0
      %1159 = vmatpush.bf16.msra.mxu0 0
      %1160 = vmatpush.bf16.msra.mxu0 0
      %1161 = vmatpush.bf16.msra.mxu0 0
      %1162 = vmatpush.bf16.msra.mxu0 %v1153
      %1163 = vmatmul.bf16.gmra.mxu0 %v1141
      %v1164 = vpop.f32.mrf.mxu0
      %v1165 = vadd.f32 0.0, %v1164
      %v1166 = vpop.f32.mrf.mxu0
      %v1167 = vadd.f32 0.0, %v1166
      %1168 = vmatmul.bf16.gmra.mxu0 %v1144
      %v1169 = vpop.f32.mrf.mxu0
      %v1170 = vadd.f32 0.0, %v1169
      %v1171 = vpop.f32.mrf.mxu0
      %v1172 = vadd.f32 0.0, %v1171
      %1173 = vmatmul.bf16.gmra.mxu0 %v1147
      %v1174 = vpop.f32.mrf.mxu0
      %v1175 = vadd.f32 0.0, %v1174
      %v1176 = vpop.f32.mrf.mxu0
      %v1177 = vadd.f32 0.0, %v1176
      %1178 = vmatmul.bf16.gmra.mxu0 %v1150
      %v1179 = vpop.f32.mrf.mxu0
      %v1180 = vadd.f32 0.0, %v1179
      %v1181 = vpop.f32.mrf.mxu0
      %v1182 = vadd.f32 0.0, %v1181
      %1183 = vdwg.mxu0
      %v1184 = vadd.f32 %v1110, %v1165
      %v1185 = vadd.f32 %v1111, %v1167
      %v1186 = vadd.f32 %v1112, %v1170
      %v1187 = vadd.f32 %v1113, %v1172
      %v1188 = vadd.f32 %v1114, %v1175
      %v1189 = vadd.f32 %v1115, %v1177
      %v1190 = vadd.f32 %v1116, %v1180
      %v1191 = vadd.f32 %v1117, %v1182
      %s1192 = scalar_lea.vmem %s1, 16
      %v1193 = vld [vmem:[%s1192] sm:$0x3]
      %v1194 = vunpack.c.l.b16 %v532
      %v1195 = vunpack.c.l.b16 %v546
      %v1196 = vunpack.c.l.b16 %v560
      %v1197 = vunpack.c.l.b16 %v574
      %v1198 = vunpack.c.l.b16 %v588
      %v1199 = vunpack.c.l.b16 %v602
      %v1200 = vunpack.c.l.b16 %v616
      %v1201 = vunpack.c.l.b16 %v630
      %v1202 = vpack.c.b16 %v1195, %v1194
      %v1203 = vpack.c.b16 %v1197, %v1196
      %v1204 = vpack.c.b16 %v1199, %v1198
      %v1205 = vpack.c.b16 %v1201, %v1200
      %v1207 = vsel %vm654, %v1202, 0
      %v1210 = vsel %vm654, %v1203, 0
      %v1213 = vsel %vm654, %v1204, 0
      %v1216 = vsel %vm654, %v1205, 0
      %v1219 = vsel %vm667, %v1193, 0
      %1221 = vmatpush.bf16.msra.mxu0 0
      %1222 = vmatpush.bf16.msra.mxu0 0
      %1223 = vmatpush.bf16.msra.mxu0 0
      %1224 = vmatpush.bf16.msra.mxu0 0
      %1225 = vmatpush.bf16.msra.mxu0 0
      %1226 = vmatpush.bf16.msra.mxu0 0
      %1227 = vmatpush.bf16.msra.mxu0 0
      %1228 = vmatpush.bf16.msra.mxu0 %v1219
      %1229 = vmatmul.bf16.gmra.mxu0 %v1207
      %v1230 = vpop.f32.mrf.mxu0
      %v1231 = vadd.f32 0.0, %v1230
      %v1232 = vpop.f32.mrf.mxu0
      %v1233 = vadd.f32 0.0, %v1232
      %1234 = vmatmul.bf16.gmra.mxu0 %v1210
      %v1235 = vpop.f32.mrf.mxu0
      %v1236 = vadd.f32 0.0, %v1235
      %v1237 = vpop.f32.mrf.mxu0
      %v1238 = vadd.f32 0.0, %v1237
      %1239 = vmatmul.bf16.gmra.mxu0 %v1213
      %v1240 = vpop.f32.mrf.mxu0
      %v1241 = vadd.f32 0.0, %v1240
      %v1242 = vpop.f32.mrf.mxu0
      %v1243 = vadd.f32 0.0, %v1242
      %1244 = vmatmul.bf16.gmra.mxu0 %v1216
      %v1245 = vpop.f32.mrf.mxu0
      %v1246 = vadd.f32 0.0, %v1245
      %v1247 = vpop.f32.mrf.mxu0
      %v1248 = vadd.f32 0.0, %v1247
      %1249 = vdwg.mxu0
      %v1250 = vadd.f32 %v1184, %v1231
      %v1251 = vadd.f32 %v1185, %v1233
      %v1252 = vadd.f32 %v1186, %v1236
      %v1253 = vadd.f32 %v1187, %v1238
      %v1254 = vadd.f32 %v1188, %v1241
      %v1255 = vadd.f32 %v1189, %v1243
      %v1256 = vadd.f32 %v1190, %v1246
      %v1257 = vadd.f32 %v1191, %v1248
      %v1258 = vld [vmem:[%s2] sm:$0x1]
      %v1260 = vperm.slane %v1258, 0
      %v1262 = vadd.f32 %v1250, %v1260
      %v1263 = vadd.f32 %v1251, %v1260
      %v1264 = vadd.f32 %v1252, %v1260
      %v1265 = vadd.f32 %v1253, %v1260
      %v1266 = vadd.f32 %v1254, %v1260
      %v1267 = vadd.f32 %v1255, %v1260
      %v1268 = vadd.f32 %v1256, %v1260
      %v1269 = vadd.f32 %v1257, %v1260
      %v1270 = vmax.f32 %v1262, 0.0
      %v1271 = vmax.f32 %v1263, 0.0
      %v1272 = vmax.f32 %v1264, 0.0
      %v1273 = vmax.f32 %v1265, 0.0
      %v1274 = vmax.f32 %v1266, 0.0
      %v1275 = vmax.f32 %v1267, 0.0
      %v1276 = vmax.f32 %v1268, 0.0
      %v1277 = vmax.f32 %v1269, 0.0
      %v1278 = vpack.c.bf16 %v1270, %v1270
      %v1279 = vpack.c.bf16 %v1271, %v1271
      %v1280 = vpack.c.bf16 %v1272, %v1272
      %v1281 = vpack.c.bf16 %v1273, %v1273
      %v1282 = vpack.c.bf16 %v1274, %v1274
      %v1283 = vpack.c.bf16 %v1275, %v1275
      %v1284 = vpack.c.bf16 %v1276, %v1276
      %v1285 = vpack.c.bf16 %v1277, %v1277
      %vm1286 = vcmask 27648
      %1287 = vst.msk [vmem:[%s197] sm:$0xf] %vm1286, %v1278
      %1288 = vst.msk [vmem:[%s197 + $0x4] sm:$0xf] %vm1286, %v1279
      %1289 = vst.msk [vmem:[%s197 + $0x8] sm:$0xf] %vm1286, %v1280
      %1290 = vst.msk [vmem:[%s197 + $0xc] sm:$0xf] %vm1286, %v1281
      %1291 = vst.msk [vmem:[%s197 + $0x10] sm:$0xf] %vm1286, %v1282
      %1292 = vst.msk [vmem:[%s197 + $0x14] sm:$0xf] %vm1286, %v1283
      %1293 = vst.msk [vmem:[%s197 + $0x18] sm:$0xf] %vm1286, %v1284
      %1294 = vst.msk [vmem:[%s197 + $0x1c] sm:$0xf] %vm1286, %v1285
      %s1295 = smul.u32 8, %s19
      %p1296 = scmp.lt.s32.totalorder %s18, 1
      %s1297 = scalar_select %p1296, %s18, 1
      %p1298 = scmp.lt.s32.totalorder %s1295, 7
      %s1299 = scalar_select %p1298, %s1295, 7
      %s1300 = smul.addr %s1297, 8
      %s1301 = sadd.s32 %s1299, %s1300
      %s1302 = smul.addr %s1301, 4
      %s1303 = scalar_lea.vmem %s3, %s1302
      // Predicated region
      $region33: #{bottleneck_forward.4} parent=31 // pred_check
        %p1304 = pneg %p114
      $region34: #{bottleneck_forward.4} parent=31 // pred_check_branch
        %1306 = sbr.rel (%p1304) target = $region36
      $region35: #{bottleneck_forward.4} parent=31 // pred_region
        %s1307 = smul.u32 8, %s19
      $region36: #{bottleneck_forward.4} parent=31 // pred_fallthru
        _
    $region32: #{bottleneck_forward.4} parent=5 // pred_fallthru
      _
    %p1308 = scmp.le.s32.totalorder 2, %s9
    // Predicated region
    $region37: #{bottleneck_forward.4} parent=5 // pred_check
      %p1309 = pneg %p1308
    $region38: #{bottleneck_forward.4} parent=5 // pred_check_branch
      %1311 = sbr.rel (%p1309) target = $region40
    $region39: #{bottleneck_forward.4} parent=5 // pred_region
      %s1312 = ssub.s32 %s9, 2
      // Predicated region
      $region41: #{bottleneck_forward.4} parent=39 // pred_check
        %p1313 = pneg %p120
      $region42: #{bottleneck_forward.4} parent=39 // pred_check_branch
        %1315 = sbr.rel (%p1313) target = $region44
      $region43: #{bottleneck_forward.4} parent=39 // pred_region
        %s1316 = smul.u32 8, %s21
        %p1317 = scmp.lt.s32.totalorder %s20, 1
        %s1318 = scalar_select %p1317, %s20, 1
        %p1319 = scmp.lt.s32.totalorder %s1316, 7
        %s1320 = scalar_select %p1319, %s1316, 7
        %s1321 = smul.addr %s1318, 8
        %s1322 = sadd.s32 %s1320, %s1321
        %s1323 = smul.addr %s1322, 4
        %s1324 = scalar_lea.vmem %s3, %s1323
      $region44: #{bottleneck_forward.4} parent=39 // pred_fallthru
        _
    $region40: #{bottleneck_forward.4} parent=5 // pred_fallthru
      _
  $region6: #{bottleneck_forward.4} parent=0 // loop_footer
    %s13 = sadd.s32 1, %s9
  $region7: #{bottleneck_forward.4} parent=0 // loop_footer_branch
    %8 = sbr.rel target = $region3
  $region8: #{bottleneck_forward.4} parent=0 // loop_exit
    _

</llo_original>
